<compile_context>
chip_gen: v7x
topology: tpu7x:2x2x1
jax: 0.10.0
libtpu: 0.0.40
codegen_flags: <defaults>
</compile_context>

<pallas_src>
import jax
import jax.numpy as jnp
from jax.experimental import pallas as pl
from jax.experimental.pallas import tpu as pltpu

# ----- small synthetic config consistent with the module -----
B = 2            # batch
V = 2            # num_views
C = 3            # image channels
H = W = 16       # spatial
KH = KW = 3      # conv kernel
INSTR_DIM = 16   # pre-embedded instruction feature dim
COND_DIM = 1024  # self.cond_dim (kept faithful; folded away at init)
VIS_FEAT = 32    # per-view vision feature dim (stand-in for resnet34's 512)
PROPRIO_DIM = 9
POLICY_HIDDEN = 32   # stand-in for 256
NUM_BLOCKS = 3
ACTION_SIZE = 7
CHUNK = 4
OUT_DIM = ACTION_SIZE * CHUNK  # 28
P = H * W                      # spatial positions per view (256)
KDIM = C * KH * KW             # im2col patch width (27)

PACK_WIDTH = 32
assert PACK_WIDTH == VIS_FEAT == POLICY_HIDDEN
assert max(INSTR_DIM, PROPRIO_DIM, OUT_DIM) <= PACK_WIDTH


# ---- parameter-pack layout: every segment is 8-row aligned (aligned sublane
#      slices in-kernel) and PACK_WIDTH lanes wide (zero-padded), so every
#      matmul contracts over a clean 32-wide dim and zero padding is harmless.
def _aligned(n, a=8):
    return ((n + a - 1) // a) * a


_SEGS = [
    ("gamma_w", PACK_WIDTH),     # folded text->FiLM gamma weight (rows 16 -> 32, zero pad)
    ("gamma_b", 1),
    ("beta_w", PACK_WIDTH),      # folded text->FiLM beta weight
    ("beta_b", 1),
    ("conv_b", 1),
    ("w_in_vis", V * VIS_FEAT),  # policy input layer, vision rows (per-view slices)
    ("w_in_prop", PACK_WIDTH),   # policy input layer, proprio rows (9 -> 32, zero pad)
    ("b_in", 1),
]
for _i in range(NUM_BLOCKS):
    _SEGS += [("blk_w%d" % _i, POLICY_HIDDEN), ("blk_b%d" % _i, 1)]
_SEGS += [("out_w", POLICY_HIDDEN), ("out_b", 1)]

PACK_OFF = {}
_off = 0
for _name, _rows in _SEGS:
    PACK_OFF[_name] = _off
    _off += _aligned(_rows)
PACK_ROWS = _off

# data pack rows (runtime inputs, lane-padded to PACK_WIDTH with zeros)
DATA_INSTR, DATA_PROP, DATA_ACT, DATA_ROWS = 0, 2, 4, 8


# ----------------------------- fused Pallas kernel -----------------------------

def _bc_policy_fused_kernel(data_ref, patches_ref, conv_w_ref, params_ref, loss_ref):
    f32 = jnp.float32

    def seg(name, rows):
        off = PACK_OFF[name]
        return params_ref[off:off + rows, :]

    instr = data_ref[DATA_INSTR:DATA_INSTR + B, :]   # [B, 32] (cols >= INSTR_DIM are 0)
    prop = data_ref[DATA_PROP:DATA_PROP + B, :]      # [B, 32] (cols >= PROPRIO_DIM are 0)
    act = data_ref[DATA_ACT:DATA_ACT + B, :]         # [B, 32] (cols >= OUT_DIM are 0)

    # ---- forward_cond + FiLM params, folded to two tiny K=32 matmuls ----
    gamma = jnp.dot(instr, seg("gamma_w", PACK_WIDTH),
                    preferred_element_type=f32) + seg("gamma_b", 1)   # [B, F]
    beta = jnp.dot(instr, seg("beta_w", PACK_WIDTH),
                   preferred_element_type=f32) + seg("beta_b", 1)     # [B, F]

    conv_w = conv_w_ref[...]              # [KDIM, F] bf16
    conv_b = seg("conv_b", 1)             # [1, F] f32
    b_in = seg("b_in", 1)                 # [1, HID]
    w_in_prop = seg("w_in_prop", PACK_WIDTH)

    # proprio half of the policy input layer (split matmul replaces the concat)
    h_prop = jnp.dot(prop, w_in_prop, preferred_element_type=f32) + b_in   # [B, HID]

    # average pool as a matmul (keeps the reduction on the otherwise-idle MXU)
    pool_row = jnp.full((1, P), 1.0 / float(P), dtype=f32)

    # ---- per-(batch, view) 256-row chunks: conv -> FiLM -> ReLU -> pool -> input layer ----
    h_rows = []
    for b in range(B):
        g = 1.0 + gamma[b:b + 1, :]       # [1, F]; cond identical across views
        bt = beta[b:b + 1, :]
        h_b = h_prop[b:b + 1, :]
        for v in range(V):
            start = (b * V + v) * P
            f_bv = jnp.dot(patches_ref[start:start + P, :], conv_w,
                           preferred_element_type=f32) + conv_b            # [P, F]
            y = jnp.maximum(f_bv * g + bt, 0.0)                            # FiLM + ReLU (f32 VPU)
            pooled = jnp.dot(pool_row, y, preferred_element_type=f32)      # [1, F] global avg pool
            w_in_v = params_ref[PACK_OFF["w_in_vis"] + v * VIS_FEAT:
                                PACK_OFF["w_in_vis"] + (v + 1) * VIS_FEAT, :]
            h_b = h_b + jnp.dot(pooled, w_in_v, preferred_element_type=f32)
        h_rows.append(jnp.maximum(h_b, 0.0))
    h = jnp.concatenate(h_rows, axis=0)   # [B, HID]

    # ---- BaseHead MLP blocks (statically unrolled) + output layer ----
    for i in range(NUM_BLOCKS):
        wb = seg("blk_w%d" % i, POLICY_HIDDEN)
        bb = seg("blk_b%d" % i, 1)
        h = jnp.maximum(jnp.dot(h, wb, preferred_element_type=f32) + bb, 0.0)
    pred = jnp.dot(h, seg("out_w", POLICY_HIDDEN),
                   preferred_element_type=f32) + seg("out_b", 1)           # [B, 32]

    # ---- MSELoss(reduction='mean'); padded lanes are zero in both pred and act ----
    d = pred - act
    s = jnp.sum(d * d, axis=1, keepdims=True)
    s = jnp.sum(s, axis=0, keepdims=True)                                   # (1, 1)
    loss_ref[...] = s * (1.0 / float(B * OUT_DIM))


# ------------------------------- JAX glue ---------------------------------

def im2col_3x3_same(x):
    """x: [N, C, H, W] (NCHW) -> patches [N*H*W, C*9] for a 3x3 SAME conv."""
    N, Cc, Hh, Ww = x.shape
    xp = jnp.pad(x, ((0, 0), (0, 0), (1, 1), (1, 1)))
    cols = []
    for dy in range(3):
        for dx in range(3):
            cols.append(xp[:, :, dy:dy + Hh, dx:dx + Ww])
    p = jnp.concatenate(cols, axis=1)                         # [N, C*9, H, W]
    p = p.transpose(0, 2, 3, 1).reshape(N * Hh * Ww, Cc * 9)  # [N*H*W, C*9]
    return p


def init_params(key):
    keys = jax.random.split(key, 8)
    s = 0.02
    f32 = jnp.float32

    # -- stand-in weights (frozen text encoder + FiLM projection), f32 --
    text_w = jax.random.normal(keys[0], (INSTR_DIM, COND_DIM), f32) * s
    text_b = jnp.zeros((1, COND_DIM), f32)
    gamma_w_film = jax.random.normal(keys[1], (COND_DIM, VIS_FEAT), f32) * s
    beta_w_film = jax.random.normal(keys[2], (COND_DIM, VIS_FEAT), f32) * s
    gamma_b_film = jnp.zeros((1, VIS_FEAT), f32)
    beta_b_film = jnp.zeros((1, VIS_FEAT), f32)

    # Fold the frozen 1024-wide chain: gb = (instr @ text_w + text_b) @ film_w + film_b
    gamma_w_eff = text_w @ gamma_w_film                       # [INSTR_DIM, F]
    gamma_b_eff = text_b @ gamma_w_film + gamma_b_film        # [1, F]
    beta_w_eff = text_w @ beta_w_film
    beta_b_eff = text_b @ beta_w_film + beta_b_film

    conv_w = jax.random.normal(keys[3], (KDIM, VIS_FEAT), f32) * s
    conv_b = jnp.zeros((1, VIS_FEAT), f32)

    in_dim = VIS_FEAT * V + PROPRIO_DIM
    pol_in_w = jax.random.normal(keys[4], (in_dim, POLICY_HIDDEN), f32) * s
    w_in_vis = pol_in_w[:VIS_FEAT * V]                        # [V*F, HID]
    w_in_prop = pol_in_w[VIS_FEAT * V:]                       # [9, HID]
    b_in = jnp.zeros((1, POLICY_HIDDEN), f32)
    blk_w = jax.random.normal(keys[5], (NUM_BLOCKS, POLICY_HIDDEN, POLICY_HIDDEN), f32) * s
    blk_b = jnp.zeros((NUM_BLOCKS, 1, POLICY_HIDDEN), f32)
    out_w = jax.random.normal(keys[6], (POLICY_HIDDEN, OUT_DIM), f32) * s
    out_b = jnp.zeros((1, OUT_DIM), f32)

    # -- build the single parameter pack --
    pack = jnp.zeros((PACK_ROWS, PACK_WIDTH), f32)

    def place(buf, name, arr):
        r, c = arr.shape
        off = PACK_OFF[name]
        return buf.at[off:off + r, :c].set(arr)

    pack = place(pack, "gamma_w", gamma_w_eff)
    pack = place(pack, "gamma_b", gamma_b_eff)
    pack = place(pack, "beta_w", beta_w_eff)
    pack = place(pack, "beta_b", beta_b_eff)
    pack = place(pack, "conv_b", conv_b)
    pack = place(pack, "w_in_vis", w_in_vis)
    pack = place(pack, "w_in_prop", w_in_prop)
    pack = place(pack, "b_in", b_in)
    for i in range(NUM_BLOCKS):
        pack = place(pack, "blk_w%d" % i, blk_w[i])
        pack = place(pack, "blk_b%d" % i, blk_b[i])
    pack = place(pack, "out_w", out_w)
    pack = place(pack, "out_b", out_b)

    return {
        "param_pack": pack,                           # [PACK_ROWS, 32] f32, one DMA
        "conv_w": conv_w.astype(jnp.bfloat16),        # [27, 32] bf16 MXU weight
    }


def bc_policy_forward(params, cur_images, cur_proprios, cur_actions, instruction):
    Bb, Vv, Cc, Hh, Ww = cur_images.shape

    # im2col of all B*V views -> [B*V*H*W, C*9] bf16 (dominant operand, halved bytes)
    vision_obs = cur_images.reshape(Bb * Vv, Cc, Hh, Ww)
    patches = im2col_3x3_same(vision_obs).astype(jnp.bfloat16)

    # pack the three runtime inputs into one small f32 buffer (one DMA)
    data = jnp.zeros((DATA_ROWS, PACK_WIDTH), jnp.float32)
    data = data.at[DATA_INSTR:DATA_INSTR + Bb, :INSTR_DIM].set(instruction)
    data = data.at[DATA_PROP:DATA_PROP + Bb, :PROPRIO_DIM].set(cur_proprios)
    data = data.at[DATA_ACT:DATA_ACT + Bb, :OUT_DIM].set(cur_actions)

    vmem = pltpu.MemorySpace.VMEM
    loss_out = pl.pallas_call(
        _bc_policy_fused_kernel,
        out_shape=jax.ShapeDtypeStruct((1, 1), jnp.float32),
        in_specs=[pl.BlockSpec(memory_space=vmem)] * 4,
        out_specs=pl.BlockSpec(memory_space=vmem),
    )(data, patches, params["conv_w"], params["param_pack"])

    loss = loss_out[0, 0]
    return loss, dict(loss=loss)


if __name__ == "__main__":
    key = jax.random.PRNGKey(0)
    k_img, k_prop, k_act, k_instr, k_params = jax.random.split(key, 5)

    cur_images = jax.random.normal(k_img, (B, V, C, H, W), jnp.float32)
    cur_proprios = jax.random.normal(k_prop, (B, PROPRIO_DIM), jnp.float32)
    cur_actions = jax.random.normal(k_act, (B, OUT_DIM), jnp.float32)
    instruction = jax.random.normal(k_instr, (B, INSTR_DIM), jnp.float32)

    params = init_params(k_params)

    loss, aux = jax.jit(bc_policy_forward)(
        params, cur_images, cur_proprios, cur_actions, instruction
    )
    jax.block_until_ready(loss)
    assert loss.shape == () and jnp.isfinite(loss)
    print("KERNEL_OK")
</pallas_src>

<mosaic_0001>
module attributes {stable_mosaic.version = 11 : i64} {
  func.func @_bc_policy_fused_kernel(%arg0: memref<8x32xf32, #tpu.memory_space<vmem>>, %arg1: memref<1024x27xbf16, #tpu.memory_space<vmem>>, %arg2: memref<27x32xbf16, #tpu.memory_space<vmem>>, %arg3: memref<352x32xf32, #tpu.memory_space<vmem>>, %arg4: memref<1x1xf32, #tpu.memory_space<vmem>>) attributes {dimension_semantics = [], scalar_prefetch = 0 : i64, scratch_operands = 0 : i64, tpu.core_type = #tpu.core_type<tc>} {
    %c0 = arith.constant 0 : index
    %c0_0 = arith.constant 0 : index
    %0 = vector.load %arg0[%c0, %c0_0] : memref<8x32xf32, #tpu.memory_space<vmem>>, vector<2x32xf32>
    %c2 = arith.constant 2 : index
    %c0_1 = arith.constant 0 : index
    %1 = vector.load %arg0[%c2, %c0_1] : memref<8x32xf32, #tpu.memory_space<vmem>>, vector<2x32xf32>
    %c4 = arith.constant 4 : index
    %c0_2 = arith.constant 0 : index
    %2 = vector.load %arg0[%c4, %c0_2] : memref<8x32xf32, #tpu.memory_space<vmem>>, vector<2x32xf32>
    %c0_3 = arith.constant 0 : index
    %c0_4 = arith.constant 0 : index
    %3 = vector.load %arg3[%c0_3, %c0_4] : memref<352x32xf32, #tpu.memory_space<vmem>>, vector<32x32xf32>
    %cst = arith.constant dense<0.000000e+00> : vector<2x32xf32>
    %4 = tpu.matmul %0, %3, %cst {dimension_numbers = #tpu.dot_dimension_numbers<[1], [0], [0], [1], [0, 0, 1, 1], [], []>} : vector<2x32xf32>, vector<32x32xf32>, vector<2x32xf32> -> vector<2x32xf32>
    %c32 = arith.constant 32 : index
    %c0_5 = arith.constant 0 : index
    %5 = vector.load %arg3[%c32, %c0_5] : memref<352x32xf32, #tpu.memory_space<vmem>>, vector<1x32xf32>
    %6 = vector.broadcast %5 : vector<1x32xf32> to vector<2x32xf32>
    %7 = arith.addf %4, %6 : vector<2x32xf32>
    %c40 = arith.constant 40 : index
    %c0_6 = arith.constant 0 : index
    %8 = vector.load %arg3[%c40, %c0_6] : memref<352x32xf32, #tpu.memory_space<vmem>>, vector<32x32xf32>
    %cst_7 = arith.constant dense<0.000000e+00> : vector<2x32xf32>
    %9 = tpu.matmul %0, %8, %cst_7 {dimension_numbers = #tpu.dot_dimension_numbers<[1], [0], [0], [1], [0, 0, 1, 1], [], []>} : vector<2x32xf32>, vector<32x32xf32>, vector<2x32xf32> -> vector<2x32xf32>
    %c72 = arith.constant 72 : index
    %c0_8 = arith.constant 0 : index
    %10 = vector.load %arg3[%c72, %c0_8] : memref<352x32xf32, #tpu.memory_space<vmem>>, vector<1x32xf32>
    %11 = vector.broadcast %10 : vector<1x32xf32> to vector<2x32xf32>
    %12 = arith.addf %9, %11 : vector<2x32xf32>
    %c0_9 = arith.constant 0 : index
    %c0_10 = arith.constant 0 : index
    %13 = vector.load %arg2[%c0_9, %c0_10] : memref<27x32xbf16, #tpu.memory_space<vmem>>, vector<27x32xbf16>
    %c80 = arith.constant 80 : index
    %c0_11 = arith.constant 0 : index
    %14 = vector.load %arg3[%c80, %c0_11] : memref<352x32xf32, #tpu.memory_space<vmem>>, vector<1x32xf32>
    %c184 = arith.constant 184 : index
    %c0_12 = arith.constant 0 : index
    %15 = vector.load %arg3[%c184, %c0_12] : memref<352x32xf32, #tpu.memory_space<vmem>>, vector<1x32xf32>
    %c152 = arith.constant 152 : index
    %c0_13 = arith.constant 0 : index
    %16 = vector.load %arg3[%c152, %c0_13] : memref<352x32xf32, #tpu.memory_space<vmem>>, vector<32x32xf32>
    %cst_14 = arith.constant dense<0.000000e+00> : vector<2x32xf32>
    %17 = tpu.matmul %1, %16, %cst_14 {dimension_numbers = #tpu.dot_dimension_numbers<[1], [0], [0], [1], [0, 0, 1, 1], [], []>} : vector<2x32xf32>, vector<32x32xf32>, vector<2x32xf32> -> vector<2x32xf32>
    %18 = vector.broadcast %15 : vector<1x32xf32> to vector<2x32xf32>
    %19 = arith.addf %17, %18 : vector<2x32xf32>
    %cst_15 = arith.constant 3.906250e-03 : f32
    %20 = vector.broadcast %cst_15 : f32 to vector<1x256xf32>
    %21 = vector.extract_strided_slice %7 {offsets = [0, 0], sizes = [1, 32], strides = [1, 1]} : vector<2x32xf32> to vector<1x32xf32>
    %cst_16 = arith.constant 1.000000e+00 : f32
    %22 = vector.broadcast %cst_16 : f32 to vector<1x32xf32>
    %23 = arith.addf %22, %21 : vector<1x32xf32>
    %24 = vector.extract_strided_slice %12 {offsets = [0, 0], sizes = [1, 32], strides = [1, 1]} : vector<2x32xf32> to vector<1x32xf32>
    %25 = vector.extract_strided_slice %19 {offsets = [0, 0], sizes = [1, 32], strides = [1, 1]} : vector<2x32xf32> to vector<1x32xf32>
    %c0_17 = arith.constant 0 : index
    %c0_18 = arith.constant 0 : index
    %26 = vector.load %arg1[%c0_17, %c0_18] : memref<1024x27xbf16, #tpu.memory_space<vmem>>, vector<256x27xbf16>
    %cst_19 = arith.constant dense<0.000000e+00> : vector<256x32xf32>
    %27 = tpu.matmul %26, %13, %cst_19 {dimension_numbers = #tpu.dot_dimension_numbers<[1], [0], [0], [1], [0, 0, 1, 1], [], []>} : vector<256x27xbf16>, vector<27x32xbf16>, vector<256x32xf32> -> vector<256x32xf32>
    %28 = vector.broadcast %14 : vector<1x32xf32> to vector<256x32xf32>
    %29 = arith.addf %27, %28 : vector<256x32xf32>
    %30 = vector.broadcast %23 : vector<1x32xf32> to vector<256x32xf32>
    %31 = arith.mulf %29, %30 : vector<256x32xf32>
    %32 = vector.broadcast %24 : vector<1x32xf32> to vector<256x32xf32>
    %33 = arith.addf %31, %32 : vector<256x32xf32>
    %cst_20 = arith.constant 0.000000e+00 : f32
    %34 = vector.broadcast %cst_20 : f32 to vector<256x32xf32>
    %35 = arith.maximumf %33, %34 : vector<256x32xf32>
    %cst_21 = arith.constant dense<0.000000e+00> : vector<1x32xf32>
    %36 = tpu.matmul %20, %35, %cst_21 {dimension_numbers = #tpu.dot_dimension_numbers<[1], [0], [0], [1], [0, 0, 1, 1], [], []>} : vector<1x256xf32>, vector<256x32xf32>, vector<1x32xf32> -> vector<1x32xf32>
    %c88 = arith.constant 88 : index
    %c0_22 = arith.constant 0 : index
    %37 = vector.load %arg3[%c88, %c0_22] : memref<352x32xf32, #tpu.memory_space<vmem>>, vector<32x32xf32>
    %cst_23 = arith.constant dense<0.000000e+00> : vector<1x32xf32>
    %38 = tpu.matmul %36, %37, %cst_23 {dimension_numbers = #tpu.dot_dimension_numbers<[1], [0], [0], [1], [0, 0, 1, 1], [], []>} : vector<1x32xf32>, vector<32x32xf32>, vector<1x32xf32> -> vector<1x32xf32>
    %39 = arith.addf %25, %38 : vector<1x32xf32>
    %c256 = arith.constant 256 : index
    %c0_24 = arith.constant 0 : index
    %40 = vector.load %arg1[%c256, %c0_24] : memref<1024x27xbf16, #tpu.memory_space<vmem>>, vector<256x27xbf16>
    %cst_25 = arith.constant dense<0.000000e+00> : vector<256x32xf32>
    %41 = tpu.matmul %40, %13, %cst_25 {dimension_numbers = #tpu.dot_dimension_numbers<[1], [0], [0], [1], [0, 0, 1, 1], [], []>} : vector<256x27xbf16>, vector<27x32xbf16>, vector<256x32xf32> -> vector<256x32xf32>
    %42 = vector.broadcast %14 : vector<1x32xf32> to vector<256x32xf32>
    %43 = arith.addf %41, %42 : vector<256x32xf32>
    %44 = vector.broadcast %23 : vector<1x32xf32> to vector<256x32xf32>
    %45 = arith.mulf %43, %44 : vector<256x32xf32>
    %46 = vector.broadcast %24 : vector<1x32xf32> to vector<256x32xf32>
    %47 = arith.addf %45, %46 : vector<256x32xf32>
    %cst_26 = arith.constant 0.000000e+00 : f32
    %48 = vector.broadcast %cst_26 : f32 to vector<256x32xf32>
    %49 = arith.maximumf %47, %48 : vector<256x32xf32>
    %cst_27 = arith.constant dense<0.000000e+00> : vector<1x32xf32>
    %50 = tpu.matmul %20, %49, %cst_27 {dimension_numbers = #tpu.dot_dimension_numbers<[1], [0], [0], [1], [0, 0, 1, 1], [], []>} : vector<1x256xf32>, vector<256x32xf32>, vector<1x32xf32> -> vector<1x32xf32>
    %c120 = arith.constant 120 : index
    %c0_28 = arith.constant 0 : index
    %51 = vector.load %arg3[%c120, %c0_28] : memref<352x32xf32, #tpu.memory_space<vmem>>, vector<32x32xf32>
    %cst_29 = arith.constant dense<0.000000e+00> : vector<1x32xf32>
    %52 = tpu.matmul %50, %51, %cst_29 {dimension_numbers = #tpu.dot_dimension_numbers<[1], [0], [0], [1], [0, 0, 1, 1], [], []>} : vector<1x32xf32>, vector<32x32xf32>, vector<1x32xf32> -> vector<1x32xf32>
    %53 = arith.addf %39, %52 : vector<1x32xf32>
    %cst_30 = arith.constant 0.000000e+00 : f32
    %54 = vector.broadcast %cst_30 : f32 to vector<1x32xf32>
    %55 = arith.maximumf %53, %54 : vector<1x32xf32>
    %56 = vector.extract_strided_slice %7 {offsets = [1, 0], sizes = [1, 32], strides = [1, 1]} : vector<2x32xf32> to vector<1x32xf32>
    %cst_31 = arith.constant 1.000000e+00 : f32
    %57 = vector.broadcast %cst_31 : f32 to vector<1x32xf32>
    %58 = arith.addf %57, %56 : vector<1x32xf32>
    %59 = vector.extract_strided_slice %12 {offsets = [1, 0], sizes = [1, 32], strides = [1, 1]} : vector<2x32xf32> to vector<1x32xf32>
    %60 = vector.extract_strided_slice %19 {offsets = [1, 0], sizes = [1, 32], strides = [1, 1]} : vector<2x32xf32> to vector<1x32xf32>
    %c512 = arith.constant 512 : index
    %c0_32 = arith.constant 0 : index
    %61 = vector.load %arg1[%c512, %c0_32] : memref<1024x27xbf16, #tpu.memory_space<vmem>>, vector<256x27xbf16>
    %cst_33 = arith.constant dense<0.000000e+00> : vector<256x32xf32>
    %62 = tpu.matmul %61, %13, %cst_33 {dimension_numbers = #tpu.dot_dimension_numbers<[1], [0], [0], [1], [0, 0, 1, 1], [], []>} : vector<256x27xbf16>, vector<27x32xbf16>, vector<256x32xf32> -> vector<256x32xf32>
    %63 = vector.broadcast %14 : vector<1x32xf32> to vector<256x32xf32>
    %64 = arith.addf %62, %63 : vector<256x32xf32>
    %65 = vector.broadcast %58 : vector<1x32xf32> to vector<256x32xf32>
    %66 = arith.mulf %64, %65 : vector<256x32xf32>
    %67 = vector.broadcast %59 : vector<1x32xf32> to vector<256x32xf32>
    %68 = arith.addf %66, %67 : vector<256x32xf32>
    %cst_34 = arith.constant 0.000000e+00 : f32
    %69 = vector.broadcast %cst_34 : f32 to vector<256x32xf32>
    %70 = arith.maximumf %68, %69 : vector<256x32xf32>
    %cst_35 = arith.constant dense<0.000000e+00> : vector<1x32xf32>
    %71 = tpu.matmul %20, %70, %cst_35 {dimension_numbers = #tpu.dot_dimension_numbers<[1], [0], [0], [1], [0, 0, 1, 1], [], []>} : vector<1x256xf32>, vector<256x32xf32>, vector<1x32xf32> -> vector<1x32xf32>
    %c88_36 = arith.constant 88 : index
    %c0_37 = arith.constant 0 : index
    %72 = vector.load %arg3[%c88_36, %c0_37] : memref<352x32xf32, #tpu.memory_space<vmem>>, vector<32x32xf32>
    %cst_38 = arith.constant dense<0.000000e+00> : vector<1x32xf32>
    %73 = tpu.matmul %71, %72, %cst_38 {dimension_numbers = #tpu.dot_dimension_numbers<[1], [0], [0], [1], [0, 0, 1, 1], [], []>} : vector<1x32xf32>, vector<32x32xf32>, vector<1x32xf32> -> vector<1x32xf32>
    %74 = arith.addf %60, %73 : vector<1x32xf32>
    %c768 = arith.constant 768 : index
    %c0_39 = arith.constant 0 : index
    %75 = vector.load %arg1[%c768, %c0_39] : memref<1024x27xbf16, #tpu.memory_space<vmem>>, vector<256x27xbf16>
    %cst_40 = arith.constant dense<0.000000e+00> : vector<256x32xf32>
    %76 = tpu.matmul %75, %13, %cst_40 {dimension_numbers = #tpu.dot_dimension_numbers<[1], [0], [0], [1], [0, 0, 1, 1], [], []>} : vector<256x27xbf16>, vector<27x32xbf16>, vector<256x32xf32> -> vector<256x32xf32>
    %77 = vector.broadcast %14 : vector<1x32xf32> to vector<256x32xf32>
    %78 = arith.addf %76, %77 : vector<256x32xf32>
    %79 = vector.broadcast %58 : vector<1x32xf32> to vector<256x32xf32>
    %80 = arith.mulf %78, %79 : vector<256x32xf32>
    %81 = vector.broadcast %59 : vector<1x32xf32> to vector<256x32xf32>
    %82 = arith.addf %80, %81 : vector<256x32xf32>
    %cst_41 = arith.constant 0.000000e+00 : f32
    %83 = vector.broadcast %cst_41 : f32 to vector<256x32xf32>
    %84 = arith.maximumf %82, %83 : vector<256x32xf32>
    %cst_42 = arith.constant dense<0.000000e+00> : vector<1x32xf32>
    %85 = tpu.matmul %20, %84, %cst_42 {dimension_numbers = #tpu.dot_dimension_numbers<[1], [0], [0], [1], [0, 0, 1, 1], [], []>} : vector<1x256xf32>, vector<256x32xf32>, vector<1x32xf32> -> vector<1x32xf32>
    %c120_43 = arith.constant 120 : index
    %c0_44 = arith.constant 0 : index
    %86 = vector.load %arg3[%c120_43, %c0_44] : memref<352x32xf32, #tpu.memory_space<vmem>>, vector<32x32xf32>
    %cst_45 = arith.constant dense<0.000000e+00> : vector<1x32xf32>
    %87 = tpu.matmul %85, %86, %cst_45 {dimension_numbers = #tpu.dot_dimension_numbers<[1], [0], [0], [1], [0, 0, 1, 1], [], []>} : vector<1x32xf32>, vector<32x32xf32>, vector<1x32xf32> -> vector<1x32xf32>
    %88 = arith.addf %74, %87 : vector<1x32xf32>
    %cst_46 = arith.constant 0.000000e+00 : f32
    %89 = vector.broadcast %cst_46 : f32 to vector<1x32xf32>
    %90 = arith.maximumf %88, %89 : vector<1x32xf32>
    %91 = tpu.concatenate %55, %90 in 0 : vector<1x32xf32>, vector<1x32xf32> -> vector<2x32xf32>
    %c192 = arith.constant 192 : index
    %c0_47 = arith.constant 0 : index
    %92 = vector.load %arg3[%c192, %c0_47] : memref<352x32xf32, #tpu.memory_space<vmem>>, vector<32x32xf32>
    %c224 = arith.constant 224 : index
    %c0_48 = arith.constant 0 : index
    %93 = vector.load %arg3[%c224, %c0_48] : memref<352x32xf32, #tpu.memory_space<vmem>>, vector<1x32xf32>
    %cst_49 = arith.constant dense<0.000000e+00> : vector<2x32xf32>
    %94 = tpu.matmul %91, %92, %cst_49 {dimension_numbers = #tpu.dot_dimension_numbers<[1], [0], [0], [1], [0, 0, 1, 1], [], []>} : vector<2x32xf32>, vector<32x32xf32>, vector<2x32xf32> -> vector<2x32xf32>
    %95 = vector.broadcast %93 : vector<1x32xf32> to vector<2x32xf32>
    %96 = arith.addf %94, %95 : vector<2x32xf32>
    %cst_50 = arith.constant 0.000000e+00 : f32
    %97 = vector.broadcast %cst_50 : f32 to vector<2x32xf32>
    %98 = arith.maximumf %96, %97 : vector<2x32xf32>
    %c232 = arith.constant 232 : index
    %c0_51 = arith.constant 0 : index
    %99 = vector.load %arg3[%c232, %c0_51] : memref<352x32xf32, #tpu.memory_space<vmem>>, vector<32x32xf32>
    %c264 = arith.constant 264 : index
    %c0_52 = arith.constant 0 : index
    %100 = vector.load %arg3[%c264, %c0_52] : memref<352x32xf32, #tpu.memory_space<vmem>>, vector<1x32xf32>
    %cst_53 = arith.constant dense<0.000000e+00> : vector<2x32xf32>
    %101 = tpu.matmul %98, %99, %cst_53 {dimension_numbers = #tpu.dot_dimension_numbers<[1], [0], [0], [1], [0, 0, 1, 1], [], []>} : vector<2x32xf32>, vector<32x32xf32>, vector<2x32xf32> -> vector<2x32xf32>
    %102 = vector.broadcast %100 : vector<1x32xf32> to vector<2x32xf32>
    %103 = arith.addf %101, %102 : vector<2x32xf32>
    %cst_54 = arith.constant 0.000000e+00 : f32
    %104 = vector.broadcast %cst_54 : f32 to vector<2x32xf32>
    %105 = arith.maximumf %103, %104 : vector<2x32xf32>
    %c272 = arith.constant 272 : index
    %c0_55 = arith.constant 0 : index
    %106 = vector.load %arg3[%c272, %c0_55] : memref<352x32xf32, #tpu.memory_space<vmem>>, vector<32x32xf32>
    %c304 = arith.constant 304 : index
    %c0_56 = arith.constant 0 : index
    %107 = vector.load %arg3[%c304, %c0_56] : memref<352x32xf32, #tpu.memory_space<vmem>>, vector<1x32xf32>
    %cst_57 = arith.constant dense<0.000000e+00> : vector<2x32xf32>
    %108 = tpu.matmul %105, %106, %cst_57 {dimension_numbers = #tpu.dot_dimension_numbers<[1], [0], [0], [1], [0, 0, 1, 1], [], []>} : vector<2x32xf32>, vector<32x32xf32>, vector<2x32xf32> -> vector<2x32xf32>
    %109 = vector.broadcast %107 : vector<1x32xf32> to vector<2x32xf32>
    %110 = arith.addf %108, %109 : vector<2x32xf32>
    %cst_58 = arith.constant 0.000000e+00 : f32
    %111 = vector.broadcast %cst_58 : f32 to vector<2x32xf32>
    %112 = arith.maximumf %110, %111 : vector<2x32xf32>
    %c312 = arith.constant 312 : index
    %c0_59 = arith.constant 0 : index
    %113 = vector.load %arg3[%c312, %c0_59] : memref<352x32xf32, #tpu.memory_space<vmem>>, vector<32x32xf32>
    %cst_60 = arith.constant dense<0.000000e+00> : vector<2x32xf32>
    %114 = tpu.matmul %112, %113, %cst_60 {dimension_numbers = #tpu.dot_dimension_numbers<[1], [0], [0], [1], [0, 0, 1, 1], [], []>} : vector<2x32xf32>, vector<32x32xf32>, vector<2x32xf32> -> vector<2x32xf32>
    %c344 = arith.constant 344 : index
    %c0_61 = arith.constant 0 : index
    %115 = vector.load %arg3[%c344, %c0_61] : memref<352x32xf32, #tpu.memory_space<vmem>>, vector<1x32xf32>
    %116 = vector.broadcast %115 : vector<1x32xf32> to vector<2x32xf32>
    %117 = arith.addf %114, %116 : vector<2x32xf32>
    %118 = arith.subf %117, %2 : vector<2x32xf32>
    %119 = arith.mulf %118, %118 : vector<2x32xf32>
    %cst_62 = arith.constant dense<0.000000e+00> : vector<2xf32>
    %120 = vector.multi_reduction <add>, %119, %cst_62 [1] : vector<2x32xf32> to vector<2xf32>
    %121 = vector.shape_cast %120 : vector<2xf32> to vector<2x1xf32>
    %cst_63 = arith.constant dense<0.000000e+00> : vector<1xf32>
    %122 = vector.multi_reduction <add>, %121, %cst_63 [0] : vector<2x1xf32> to vector<1xf32>
    %123 = vector.shape_cast %122 : vector<1xf32> to vector<1x1xf32>
    %cst_64 = arith.constant 0.0178571437 : f32
    %124 = vector.broadcast %cst_64 : f32 to vector<1x1xf32>
    %125 = arith.mulf %123, %124 : vector<1x1xf32>
    %c0_65 = arith.constant 0 : index
    %c0_66 = arith.constant 0 : index
    %126 = vector.load %arg4[%c0_65, %c0_66] : memref<1x1xf32, #tpu.memory_space<vmem>>, vector<1x1xf32>
    tpu.vector_store %arg4[%c0_65, %c0_66], %125 {strides = array<i32>} : memref<1x1xf32, #tpu.memory_space<vmem>>, vector<1x1xf32>,
    return
  }
}

</mosaic_0001>

<llo_original>
// kernel: bc_policy_forward.1
$region0: #{bc_policy_forward.1}
  #allocation0 [shape = 'u32[]', space=smem, size = 0x4, offset = 0x4, fixed_abs, tag = 'smem constant byte address 0x4 - core index']
  #allocation1 [shape = 'u32[144,128]{1,0:T(1,128)}', space=vmem, size = 0x12000, scoped, tag = 'internal scratch']
  %s0 = inlined_call_operand.vmem [shape: f32[8,32], index: 0, kind: input, shape index: {}]
  %s1 = inlined_call_operand.vmem [shape: bf16[1024,27], index: 1, kind: input, shape index: {}]
  %s2 = inlined_call_operand.vmem [shape: bf16[27,32], index: 2, kind: input, shape index: {}]
  %s3 = inlined_call_operand.vmem [shape: f32[352,32], index: 3, kind: input, shape index: {}]
  %s4 = inlined_call_operand.hbm [shape: f32[1,1], index: 4, kind: output, shape index: {}]
  %s5 = sld [smem:[#allocation0]]
  $region26: #{bc_policy_forward.1} parent=0
    _
  %s7 = ssub.s32 1, %s5
  %s8 = scalar_select 0, %s7, %s5
  $region1: #{bc_policy_forward.1} parent=0
    #allocation2 [shape = 'u8[512]{0}', space=vmem, size = 0x400, scoped, tag = 'output window, operand 0, single buffered']
    #allocation3 [shape = 's32[1]{0}', space=sflag, size = 0x4, scoped, tag = 'scoped memory for bc_policy_forward.1']
    %9 = vsyncpa [#allocation3], 0
    // Predicated region
    $region2: #{bc_policy_forward.1} parent=1 // pred_check
      _
    $region3: #{bc_policy_forward.1} parent=1 // pred_check_branch
      %11 = sbr.rel (0) target = $region5
    $region4: #{bc_policy_forward.1} parent=1 // pred_region
      _
    $region5: #{bc_policy_forward.1} parent=1 // pred_fallthru
      _
    // Predicated region
    $region6: #{bc_policy_forward.1} parent=1 // pred_check
      _
    $region7: #{bc_policy_forward.1} parent=1 // pred_check_branch
      %13 = sbr.rel (0) target = $region9
    $region8: #{bc_policy_forward.1} parent=1 // pred_region
      _
    $region9: #{bc_policy_forward.1} parent=1 // pred_fallthru
      _
    // Predicated region
    $region10: #{bc_policy_forward.1} parent=1 // pred_check
      _
    $region11: #{bc_policy_forward.1} parent=1 // pred_check_branch
      %15 = sbr.rel (0) target = $region13
    $region12: #{bc_policy_forward.1} parent=1 // pred_region
      _
    $region13: #{bc_policy_forward.1} parent=1 // pred_fallthru
      _
    // Predicated region
    $region14: #{bc_policy_forward.1} parent=1 // pred_check
      _
    $region15: #{bc_policy_forward.1} parent=1 // pred_check_branch
      %17 = sbr.rel (0) target = $region17
    $region16: #{bc_policy_forward.1} parent=1 // pred_region
      _
    $region17: #{bc_policy_forward.1} parent=1 // pred_fallthru
      _
    %v19 = vld [vmem:[%s0] sm:$0x3]
    %v20 = vld [vmem:[%s0 + $0x2] sm:$0x3]
    %v21 = vld [vmem:[%s0 + $0x4] sm:$0x3]
    %v22 = vld [vmem:[%s3] sm:$0xff]
    %v23 = vld [vmem:[%s3 + $0x8] sm:$0xff]
    %v24 = vld [vmem:[%s3 + $0x10] sm:$0xff]
    %v25 = vld [vmem:[%s3 + $0x18] sm:$0xff]
    %v26 = vld [vmem:[%s3 + $0x20] sm:$0x1]
    %v27 = vlaneseq
    %v28 = vshrl.u32 %v27, 7
    %v29 = vsub.s32 0, %v28
    %v30 = vrot.slane %v26, %v29
    %vm31 = vcmask 261120
    %v33 = vsel %vm31, %v19, 0
    %35 = vmatprep.subr.mxu0 0.0
    %36 = vmatpush1.msra.mxu0 %v22
    %37 = vmatprep.subr.mxu0 0.0
    %38 = vmatpush1.msra.mxu0 %v23
    %39 = vmatprep.subr.mxu0 0.0
    %40 = vmatpush1.msra.mxu0 %v24
    %41 = vmatprep.subr.mxu0 0.0
    %42 = vmatpush1.msra.mxu0 %v25
    %43 = vmatprep.subr.mxu0 0.0
    %44 = vmatpush1.msra.mxu0 0.0
    %45 = vmatprep.subr.mxu0 0.0
    %46 = vmatpush1.msra.mxu0 0.0
    %47 = vmatprep.subr.mxu0 0.0
    %48 = vmatpush1.msra.mxu0 0.0
    %49 = vmatprep.subr.mxu0 0.0
    %50 = vmatpush1.msra.mxu0 0.0
    %51 = vmatprep.subr.mxu0 0.0
    %52 = vmatpush1.msra.mxu0 0.0
    %53 = vmatprep.subr.mxu0 0.0
    %54 = vmatpush1.msra.mxu0 0.0
    %55 = vmatprep.subr.mxu0 0.0
    %56 = vmatpush1.msra.mxu0 0.0
    %57 = vmatprep.subr.mxu0 0.0
    %58 = vmatpush1.msra.mxu0 0.0
    %59 = vmatprep.subr.mxu0 0.0
    %60 = vmatpush1.msra.mxu0 0.0
    %61 = vmatprep.subr.mxu0 0.0
    %62 = vmatpush1.msra.mxu0 0.0
    %63 = vmatprep.subr.mxu0 0.0
    %64 = vmatpush1.msra.mxu0 0.0
    %65 = vmatprep.subr.mxu0 0.0
    %66 = vmatpush1.msra.mxu0 0.0
    %67 = vmatprep.subr.mxu0 0.0
    %68 = vmatpush1.msra.mxu0 0.0
    %69 = vmatprep.subr.mxu0 0.0
    %70 = vmatpush1.msra.mxu0 0.0
    %71 = vmatprep.subr.mxu0 0.0
    %72 = vmatpush1.msra.mxu0 0.0
    %73 = vmatprep.subr.mxu0 0.0
    %74 = vmatpush1.msra.mxu0 0.0
    %75 = vmatprep.subr.mxu0 0.0
    %76 = vmatpush1.msra.mxu0 0.0
    %77 = vmatprep.subr.mxu0 0.0
    %78 = vmatpush1.msra.mxu0 0.0
    %79 = vmatprep.subr.mxu0 0.0
    %80 = vmatpush1.msra.mxu0 0.0
    %81 = vmatprep.subr.mxu0 0.0
    %82 = vmatpush1.msra.mxu0 0.0
    %83 = vmatprep.subr.mxu0 0.0
    %84 = vmatpush1.msra.mxu0 0.0
    %85 = vmatprep.subr.mxu0 0.0
    %86 = vmatpush1.msra.mxu0 0.0
    %87 = vmatprep.subr.mxu0 0.0
    %88 = vmatpush1.msra.mxu0 0.0
    %89 = vmatprep.subr.mxu0 0.0
    %90 = vmatpush1.msra.mxu0 0.0
    %91 = vmatprep.subr.mxu0 0.0
    %92 = vmatpush1.msra.mxu0 0.0
    %93 = vmatprep.subr.mxu0 0.0
    %94 = vmatpush1.msra.mxu0 0.0
    %95 = vmatprep.subr.mxu0 0.0
    %96 = vmatpush1.msra.mxu0 0.0
    %97 = vmatprep.subr.mxu0 0.0
    %98 = vmatpush1.msra.mxu0 0.0
    %99 = vmatprep.mubr.f32.mxu0 0.0
    %100 = vmatmul.mubr.f32.gmra.mrb[0].mxu0 %v33
    %v101 = vpop.f32.mrb[0].mxu0
    %v102 = vadd.f32 %v30, %v101
    %v103 = vpop.f32.mrb[0].mxu0
    %104 = vdwg.mxu0
    %v105 = vld [vmem:[%s3 + $0x28] sm:$0xff]
    %v106 = vld [vmem:[%s3 + $0x30] sm:$0xff]
    %v107 = vld [vmem:[%s3 + $0x38] sm:$0xff]
    %v108 = vld [vmem:[%s3 + $0x40] sm:$0xff]
    %v109 = vld [vmem:[%s3 + $0x48] sm:$0x1]
    %v110 = vlaneseq
    %v111 = vshrl.u32 %v110, 7
    %v112 = vsub.s32 0, %v111
    %v113 = vrot.slane %v109, %v112
    %114 = vmatprep.subr.mxu0 0.0
    %115 = vmatpush1.msra.mxu0 %v105
    %116 = vmatprep.subr.mxu0 0.0
    %117 = vmatpush1.msra.mxu0 %v106
    %118 = vmatprep.subr.mxu0 0.0
    %119 = vmatpush1.msra.mxu0 %v107
    %120 = vmatprep.subr.mxu0 0.0
    %121 = vmatpush1.msra.mxu0 %v108
    %122 = vmatprep.subr.mxu0 0.0
    %123 = vmatpush1.msra.mxu0 0.0
    %124 = vmatprep.subr.mxu0 0.0
    %125 = vmatpush1.msra.mxu0 0.0
    %126 = vmatprep.subr.mxu0 0.0
    %127 = vmatpush1.msra.mxu0 0.0
    %128 = vmatprep.subr.mxu0 0.0
    %129 = vmatpush1.msra.mxu0 0.0
    %130 = vmatprep.subr.mxu0 0.0
    %131 = vmatpush1.msra.mxu0 0.0
    %132 = vmatprep.subr.mxu0 0.0
    %133 = vmatpush1.msra.mxu0 0.0
    %134 = vmatprep.subr.mxu0 0.0
    %135 = vmatpush1.msra.mxu0 0.0
    %136 = vmatprep.subr.mxu0 0.0
    %137 = vmatpush1.msra.mxu0 0.0
    %138 = vmatprep.subr.mxu0 0.0
    %139 = vmatpush1.msra.mxu0 0.0
    %140 = vmatprep.subr.mxu0 0.0
    %141 = vmatpush1.msra.mxu0 0.0
    %142 = vmatprep.subr.mxu0 0.0
    %143 = vmatpush1.msra.mxu0 0.0
    %144 = vmatprep.subr.mxu0 0.0
    %145 = vmatpush1.msra.mxu0 0.0
    %146 = vmatprep.subr.mxu0 0.0
    %147 = vmatpush1.msra.mxu0 0.0
    %148 = vmatprep.subr.mxu0 0.0
    %149 = vmatpush1.msra.mxu0 0.0
    %150 = vmatprep.subr.mxu0 0.0
    %151 = vmatpush1.msra.mxu0 0.0
    %152 = vmatprep.subr.mxu0 0.0
    %153 = vmatpush1.msra.mxu0 0.0
    %154 = vmatprep.subr.mxu0 0.0
    %155 = vmatpush1.msra.mxu0 0.0
    %156 = vmatprep.subr.mxu0 0.0
    %157 = vmatpush1.msra.mxu0 0.0
    %158 = vmatprep.subr.mxu0 0.0
    %159 = vmatpush1.msra.mxu0 0.0
    %160 = vmatprep.subr.mxu0 0.0
    %161 = vmatpush1.msra.mxu0 0.0
    %162 = vmatprep.subr.mxu0 0.0
    %163 = vmatpush1.msra.mxu0 0.0
    %164 = vmatprep.subr.mxu0 0.0
    %165 = vmatpush1.msra.mxu0 0.0
    %166 = vmatprep.subr.mxu0 0.0
    %167 = vmatpush1.msra.mxu0 0.0
    %168 = vmatprep.subr.mxu0 0.0
    %169 = vmatpush1.msra.mxu0 0.0
    %170 = vmatprep.subr.mxu0 0.0
    %171 = vmatpush1.msra.mxu0 0.0
    %172 = vmatprep.subr.mxu0 0.0
    %173 = vmatpush1.msra.mxu0 0.0
    %174 = vmatprep.subr.mxu0 0.0
    %175 = vmatpush1.msra.mxu0 0.0
    %176 = vmatprep.subr.mxu0 0.0
    %177 = vmatpush1.msra.mxu0 0.0
    %178 = vmatprep.mubr.f32.mxu0 0.0
    %179 = vmatmul.mubr.f32.gmra.mrb[0].mxu0 %v33
    %v180 = vpop.f32.mrb[0].mxu0
    %v181 = vadd.f32 %v113, %v180
    %v182 = vpop.f32.mrb[0].mxu0
    %183 = vdwg.mxu0
    %v184 = vld [vmem:[%s2] sm:$0xf]
    %v185 = vld [vmem:[%s2 + $0x4] sm:$0xf]
    %v186 = vld [vmem:[%s2 + $0x8] sm:$0xf]
    %v187 = vld [vmem:[%s2 + $0xc] sm:$0x3]
    %v188 = vld [vmem:[%s3 + $0x50] sm:$0x1]
    %v189 = vld [vmem:[%s3 + $0xb8] sm:$0x1]
    %v190 = vld [vmem:[%s3 + $0x98] sm:$0xff]
    %v191 = vld [vmem:[%s3 + $0xa0] sm:$0xff]
    %v192 = vld [vmem:[%s3 + $0xa8] sm:$0xff]
    %v193 = vld [vmem:[%s3 + $0xb0] sm:$0xff]
    %v194 = vlaneseq
    %v195 = vshrl.u32 %v194, 7
    %v196 = vsub.s32 0, %v195
    %v197 = vrot.slane %v189, %v196
    %v199 = vsel %vm31, %v20, 0
    %201 = vmatprep.subr.mxu0 0.0
    %202 = vmatpush1.msra.mxu0 %v190
    %203 = vmatprep.subr.mxu0 0.0
    %204 = vmatpush1.msra.mxu0 %v191
    %205 = vmatprep.subr.mxu0 0.0
    %206 = vmatpush1.msra.mxu0 %v192
    %207 = vmatprep.subr.mxu0 0.0
    %208 = vmatpush1.msra.mxu0 %v193
    %209 = vmatprep.subr.mxu0 0.0
    %210 = vmatpush1.msra.mxu0 0.0
    %211 = vmatprep.subr.mxu0 0.0
    %212 = vmatpush1.msra.mxu0 0.0
    %213 = vmatprep.subr.mxu0 0.0
    %214 = vmatpush1.msra.mxu0 0.0
    %215 = vmatprep.subr.mxu0 0.0
    %216 = vmatpush1.msra.mxu0 0.0
    %217 = vmatprep.subr.mxu0 0.0
    %218 = vmatpush1.msra.mxu0 0.0
    %219 = vmatprep.subr.mxu0 0.0
    %220 = vmatpush1.msra.mxu0 0.0
    %221 = vmatprep.subr.mxu0 0.0
    %222 = vmatpush1.msra.mxu0 0.0
    %223 = vmatprep.subr.mxu0 0.0
    %224 = vmatpush1.msra.mxu0 0.0
    %225 = vmatprep.subr.mxu0 0.0
    %226 = vmatpush1.msra.mxu0 0.0
    %227 = vmatprep.subr.mxu0 0.0
    %228 = vmatpush1.msra.mxu0 0.0
    %229 = vmatprep.subr.mxu0 0.0
    %230 = vmatpush1.msra.mxu0 0.0
    %231 = vmatprep.subr.mxu0 0.0
    %232 = vmatpush1.msra.mxu0 0.0
    %233 = vmatprep.subr.mxu0 0.0
    %234 = vmatpush1.msra.mxu0 0.0
    %235 = vmatprep.subr.mxu0 0.0
    %236 = vmatpush1.msra.mxu0 0.0
    %237 = vmatprep.subr.mxu0 0.0
    %238 = vmatpush1.msra.mxu0 0.0
    %239 = vmatprep.subr.mxu0 0.0
    %240 = vmatpush1.msra.mxu0 0.0
    %241 = vmatprep.subr.mxu0 0.0
    %242 = vmatpush1.msra.mxu0 0.0
    %243 = vmatprep.subr.mxu0 0.0
    %244 = vmatpush1.msra.mxu0 0.0
    %245 = vmatprep.subr.mxu0 0.0
    %246 = vmatpush1.msra.mxu0 0.0
    %247 = vmatprep.subr.mxu0 0.0
    %248 = vmatpush1.msra.mxu0 0.0
    %249 = vmatprep.subr.mxu0 0.0
    %250 = vmatpush1.msra.mxu0 0.0
    %251 = vmatprep.subr.mxu0 0.0
    %252 = vmatpush1.msra.mxu0 0.0
    %253 = vmatprep.subr.mxu0 0.0
    %254 = vmatpush1.msra.mxu0 0.0
    %255 = vmatprep.subr.mxu0 0.0
    %256 = vmatpush1.msra.mxu0 0.0
    %257 = vmatprep.subr.mxu0 0.0
    %258 = vmatpush1.msra.mxu0 0.0
    %259 = vmatprep.subr.mxu0 0.0
    %260 = vmatpush1.msra.mxu0 0.0
    %261 = vmatprep.subr.mxu0 0.0
    %262 = vmatpush1.msra.mxu0 0.0
    %263 = vmatprep.subr.mxu0 0.0
    %264 = vmatpush1.msra.mxu0 0.0
    %265 = vmatprep.mubr.f32.mxu0 0.0
    %266 = vmatmul.mubr.f32.gmra.mrb[0].mxu0 %v199
    %v267 = vpop.f32.mrb[0].mxu0
    %v268 = vadd.f32 %v197, %v267
    %v269 = vpop.f32.mrb[0].mxu0
    %270 = vdwg.mxu0
    %v271 = vadd.f32 %v102, 1.0
    %v272 = vld [vmem:[%s1] sm:$0xf]
    %v273 = vld [vmem:[%s1 + $0x4] sm:$0xf]
    %v274 = vld [vmem:[%s1 + $0x8] sm:$0xf]
    %v275 = vld [vmem:[%s1 + $0xc] sm:$0xf]
    %v276 = vld [vmem:[%s1 + $0x10] sm:$0xf]
    %v277 = vld [vmem:[%s1 + $0x14] sm:$0xf]
    %v278 = vld [vmem:[%s1 + $0x18] sm:$0xf]
    %v279 = vld [vmem:[%s1 + $0x1c] sm:$0xf]
    %v280 = vld [vmem:[%s1 + $0x20] sm:$0xf]
    %v281 = vld [vmem:[%s1 + $0x24] sm:$0xf]
    %v282 = vld [vmem:[%s1 + $0x28] sm:$0xf]
    %v283 = vld [vmem:[%s1 + $0x2c] sm:$0xf]
    %v284 = vld [vmem:[%s1 + $0x30] sm:$0xf]
    %v285 = vld [vmem:[%s1 + $0x34] sm:$0xf]
    %v286 = vld [vmem:[%s1 + $0x38] sm:$0xf]
    %v287 = vld [vmem:[%s1 + $0x3c] sm:$0xf]
    %v288 = vld [vmem:[%s1 + $0x40] sm:$0xf]
    %v289 = vld [vmem:[%s1 + $0x44] sm:$0xf]
    %v290 = vld [vmem:[%s1 + $0x48] sm:$0xf]
    %v291 = vld [vmem:[%s1 + $0x4c] sm:$0xf]
    %v292 = vld [vmem:[%s1 + $0x50] sm:$0xf]
    %v293 = vld [vmem:[%s1 + $0x54] sm:$0xf]
    %v294 = vld [vmem:[%s1 + $0x58] sm:$0xf]
    %v295 = vld [vmem:[%s1 + $0x5c] sm:$0xf]
    %v296 = vld [vmem:[%s1 + $0x60] sm:$0xf]
    %v297 = vld [vmem:[%s1 + $0x64] sm:$0xf]
    %v298 = vld [vmem:[%s1 + $0x68] sm:$0xf]
    %v299 = vld [vmem:[%s1 + $0x6c] sm:$0xf]
    %v300 = vld [vmem:[%s1 + $0x70] sm:$0xf]
    %v301 = vld [vmem:[%s1 + $0x74] sm:$0xf]
    %v302 = vld [vmem:[%s1 + $0x78] sm:$0xf]
    %v303 = vld [vmem:[%s1 + $0x7c] sm:$0xf]
    %v304 = vlaneseq
    %v305 = vshrl.u32 %v304, 7
    %v306 = vsub.s32 0, %v305
    %v307 = vrot.slane %v188, %v306
    %v340 = vunpack.c.l.b16 %v272
    %v341 = vunpack.c.l.b16 %v273
    %v342 = vunpack.c.l.b16 %v274
    %v343 = vunpack.c.l.b16 %v275
    %v344 = vunpack.c.l.b16 %v276
    %v345 = vunpack.c.l.b16 %v277
    %v346 = vunpack.c.l.b16 %v278
    %v347 = vunpack.c.l.b16 %v279
    %v348 = vunpack.c.l.b16 %v280
    %v349 = vunpack.c.l.b16 %v281
    %v350 = vunpack.c.l.b16 %v282
    %v351 = vunpack.c.l.b16 %v283
    %v352 = vunpack.c.l.b16 %v284
    %v353 = vunpack.c.l.b16 %v285
    %v354 = vunpack.c.l.b16 %v286
    %v355 = vunpack.c.l.b16 %v287
    %v356 = vunpack.c.l.b16 %v288
    %v357 = vunpack.c.l.b16 %v289
    %v358 = vunpack.c.l.b16 %v290
    %v359 = vunpack.c.l.b16 %v291
    %v360 = vunpack.c.l.b16 %v292
    %v361 = vunpack.c.l.b16 %v293
    %v362 = vunpack.c.l.b16 %v294
    %v363 = vunpack.c.l.b16 %v295
    %v364 = vunpack.c.l.b16 %v296
    %v365 = vunpack.c.l.b16 %v297
    %v366 = vunpack.c.l.b16 %v298
    %v367 = vunpack.c.l.b16 %v299
    %v368 = vunpack.c.l.b16 %v300
    %v369 = vunpack.c.l.b16 %v301
    %v370 = vunpack.c.l.b16 %v302
    %v371 = vunpack.c.l.b16 %v303
    %v372 = vpack.c.b16 %v341, %v340
    %v373 = vpack.c.b16 %v343, %v342
    %v374 = vpack.c.b16 %v345, %v344
    %v375 = vpack.c.b16 %v347, %v346
    %v376 = vpack.c.b16 %v349, %v348
    %v377 = vpack.c.b16 %v351, %v350
    %v378 = vpack.c.b16 %v353, %v352
    %v379 = vpack.c.b16 %v355, %v354
    %v380 = vpack.c.b16 %v357, %v356
    %v381 = vpack.c.b16 %v359, %v358
    %v382 = vpack.c.b16 %v361, %v360
    %v383 = vpack.c.b16 %v363, %v362
    %v384 = vpack.c.b16 %v365, %v364
    %v385 = vpack.c.b16 %v367, %v366
    %v386 = vpack.c.b16 %v369, %v368
    %v387 = vpack.c.b16 %v371, %v370
    %v392 = vunpack.c.l.b16 %v184
    %v393 = vunpack.c.l.b16 %v185
    %v394 = vunpack.c.l.b16 %v186
    %v395 = vunpack.c.l.b16 %v187
    %v396 = vpack.c.b16 %v393, %v392
    %v397 = vpack.c.b16 %v395, %v394
    %vm399 = vcmask 220160
    %v401 = vsel %vm399, %v372, 0
    %v404 = vsel %vm399, %v373, 0
    %v407 = vsel %vm399, %v374, 0
    %v410 = vsel %vm399, %v375, 0
    %v413 = vsel %vm399, %v376, 0
    %v416 = vsel %vm399, %v377, 0
    %v419 = vsel %vm399, %v378, 0
    %v422 = vsel %vm399, %v379, 0
    %v425 = vsel %vm399, %v380, 0
    %v428 = vsel %vm399, %v381, 0
    %v431 = vsel %vm399, %v382, 0
    %v434 = vsel %vm399, %v383, 0
    %v437 = vsel %vm399, %v384, 0
    %v440 = vsel %vm399, %v385, 0
    %v443 = vsel %vm399, %v386, 0
    %v446 = vsel %vm399, %v387, 0
    %vm448 = vcmask 1044480
    %vm449 = vcmask 1045504
    %v450 = vsel %vm448, 4294967295, 65535
    %v451 = vsel %vm449, %v450, 0
    %v453 = vand.u32 %v397, %v451
    %455 = vmatprep.subr.bf16.mxu0 0
    %456 = vmatpush1.bf16.msra.mxu0 %v396
    %457 = vmatprep.subr.bf16.mxu0 0
    %458 = vmatpush1.bf16.msra.mxu0 %v453
    %459 = vmatprep.subr.bf16.mxu0 0
    %460 = vmatpush1.bf16.msra.mxu0 0
    %461 = vmatprep.subr.bf16.mxu0 0
    %462 = vmatpush1.bf16.msra.mxu0 0
    %463 = vmatprep.subr.bf16.mxu0 0
    %464 = vmatpush1.bf16.msra.mxu0 0
    %465 = vmatprep.subr.bf16.mxu0 0
    %466 = vmatpush1.bf16.msra.mxu0 0
    %467 = vmatprep.subr.bf16.mxu0 0
    %468 = vmatpush1.bf16.msra.mxu0 0
    %469 = vmatprep.subr.bf16.mxu0 0
    %470 = vmatpush1.bf16.msra.mxu0 0
    %471 = vmatprep.subr.bf16.mxu0 0
    %472 = vmatpush1.bf16.msra.mxu0 0
    %473 = vmatprep.subr.bf16.mxu0 0
    %474 = vmatpush1.bf16.msra.mxu0 0
    %475 = vmatprep.subr.bf16.mxu0 0
    %476 = vmatpush1.bf16.msra.mxu0 0
    %477 = vmatprep.subr.bf16.mxu0 0
    %478 = vmatpush1.bf16.msra.mxu0 0
    %479 = vmatprep.subr.bf16.mxu0 0
    %480 = vmatpush1.bf16.msra.mxu0 0
    %481 = vmatprep.subr.bf16.mxu0 0
    %482 = vmatpush1.bf16.msra.mxu0 0
    %483 = vmatprep.subr.bf16.mxu0 0
    %484 = vmatpush1.bf16.msra.mxu0 0
    %485 = vmatprep.subr.bf16.mxu0 0
    %486 = vmatpush1.bf16.msra.mxu0 0
    %487 = vmatprep.mubr.bf16.mxu0 0
    %488 = vmatmul.mubr.bf16.gmra.mrb[0].mxu0 %v401
    %v489 = vpop.f32.mrb[0].mxu0
    %v490 = vadd.f32 %v307, %v489
    %v491 = vpop.f32.mrb[0].mxu0
    %v492 = vpop.f32.mrb[0].mxu0
    %v493 = vadd.f32 %v307, %v492
    %v494 = vpop.f32.mrb[0].mxu0
    %495 = vmatprep.mubr.bf16.mxu0 0
    %496 = vmatmul.mubr.bf16.gmra.mrb[0].mxu0 %v404
    %v497 = vpop.f32.mrb[0].mxu0
    %v498 = vadd.f32 %v307, %v497
    %v499 = vpop.f32.mrb[0].mxu0
    %v500 = vpop.f32.mrb[0].mxu0
    %v501 = vadd.f32 %v307, %v500
    %v502 = vpop.f32.mrb[0].mxu0
    %503 = vmatprep.mubr.bf16.mxu0 0
    %504 = vmatmul.mubr.bf16.gmra.mrb[0].mxu0 %v407
    %v505 = vpop.f32.mrb[0].mxu0
    %v506 = vadd.f32 %v307, %v505
    %v507 = vpop.f32.mrb[0].mxu0
    %v508 = vpop.f32.mrb[0].mxu0
    %v509 = vadd.f32 %v307, %v508
    %v510 = vpop.f32.mrb[0].mxu0
    %511 = vmatprep.mubr.bf16.mxu0 0
    %512 = vmatmul.mubr.bf16.gmra.mrb[0].mxu0 %v410
    %v513 = vpop.f32.mrb[0].mxu0
    %v514 = vadd.f32 %v307, %v513
    %v515 = vpop.f32.mrb[0].mxu0
    %v516 = vpop.f32.mrb[0].mxu0
    %v517 = vadd.f32 %v307, %v516
    %v518 = vpop.f32.mrb[0].mxu0
    %519 = vmatprep.mubr.bf16.mxu0 0
    %520 = vmatmul.mubr.bf16.gmra.mrb[0].mxu0 %v413
    %v521 = vpop.f32.mrb[0].mxu0
    %v522 = vadd.f32 %v307, %v521
    %v523 = vpop.f32.mrb[0].mxu0
    %v524 = vpop.f32.mrb[0].mxu0
    %v525 = vadd.f32 %v307, %v524
    %v526 = vpop.f32.mrb[0].mxu0
    %527 = vmatprep.mubr.bf16.mxu0 0
    %528 = vmatmul.mubr.bf16.gmra.mrb[0].mxu0 %v416
    %v529 = vpop.f32.mrb[0].mxu0
    %v530 = vadd.f32 %v307, %v529
    %v531 = vpop.f32.mrb[0].mxu0
    %v532 = vpop.f32.mrb[0].mxu0
    %v533 = vadd.f32 %v307, %v532
    %v534 = vpop.f32.mrb[0].mxu0
    %535 = vmatprep.mubr.bf16.mxu0 0
    %536 = vmatmul.mubr.bf16.gmra.mrb[0].mxu0 %v419
    %v537 = vpop.f32.mrb[0].mxu0
    %v538 = vadd.f32 %v307, %v537
    %v539 = vpop.f32.mrb[0].mxu0
    %v540 = vpop.f32.mrb[0].mxu0
    %v541 = vadd.f32 %v307, %v540
    %v542 = vpop.f32.mrb[0].mxu0
    %543 = vmatprep.mubr.bf16.mxu0 0
    %544 = vmatmul.mubr.bf16.gmra.mrb[0].mxu0 %v422
    %v545 = vpop.f32.mrb[0].mxu0
    %v546 = vadd.f32 %v307, %v545
    %v547 = vpop.f32.mrb[0].mxu0
    %v548 = vpop.f32.mrb[0].mxu0
    %v549 = vadd.f32 %v307, %v548
    %v550 = vpop.f32.mrb[0].mxu0
    %551 = vmatprep.mubr.bf16.mxu0 0
    %552 = vmatmul.mubr.bf16.gmra.mrb[0].mxu0 %v425
    %v553 = vpop.f32.mrb[0].mxu0
    %v554 = vadd.f32 %v307, %v553
    %v555 = vpop.f32.mrb[0].mxu0
    %v556 = vpop.f32.mrb[0].mxu0
    %v557 = vadd.f32 %v307, %v556
    %v558 = vpop.f32.mrb[0].mxu0
    %559 = vmatprep.mubr.bf16.mxu0 0
    %560 = vmatmul.mubr.bf16.gmra.mrb[0].mxu0 %v428
    %v561 = vpop.f32.mrb[0].mxu0
    %v562 = vadd.f32 %v307, %v561
    %v563 = vpop.f32.mrb[0].mxu0
    %v564 = vpop.f32.mrb[0].mxu0
    %v565 = vadd.f32 %v307, %v564
    %v566 = vpop.f32.mrb[0].mxu0
    %567 = vmatprep.mubr.bf16.mxu0 0
    %568 = vmatmul.mubr.bf16.gmra.mrb[0].mxu0 %v431
    %v569 = vpop.f32.mrb[0].mxu0
    %v570 = vadd.f32 %v307, %v569
    %v571 = vpop.f32.mrb[0].mxu0
    %v572 = vpop.f32.mrb[0].mxu0
    %v573 = vadd.f32 %v307, %v572
    %v574 = vpop.f32.mrb[0].mxu0
    %575 = vmatprep.mubr.bf16.mxu0 0
    %576 = vmatmul.mubr.bf16.gmra.mrb[0].mxu0 %v434
    %v577 = vpop.f32.mrb[0].mxu0
    %v578 = vadd.f32 %v307, %v577
    %v579 = vpop.f32.mrb[0].mxu0
    %v580 = vpop.f32.mrb[0].mxu0
    %v581 = vadd.f32 %v307, %v580
    %v582 = vpop.f32.mrb[0].mxu0
    %583 = vmatprep.mubr.bf16.mxu0 0
    %584 = vmatmul.mubr.bf16.gmra.mrb[0].mxu0 %v437
    %v585 = vpop.f32.mrb[0].mxu0
    %v586 = vadd.f32 %v307, %v585
    %v587 = vpop.f32.mrb[0].mxu0
    %v588 = vpop.f32.mrb[0].mxu0
    %v589 = vadd.f32 %v307, %v588
    %v590 = vpop.f32.mrb[0].mxu0
    %591 = vmatprep.mubr.bf16.mxu0 0
    %592 = vmatmul.mubr.bf16.gmra.mrb[0].mxu0 %v440
    %v593 = vpop.f32.mrb[0].mxu0
    %v594 = vadd.f32 %v307, %v593
    %v595 = vpop.f32.mrb[0].mxu0
    %v596 = vpop.f32.mrb[0].mxu0
    %v597 = vadd.f32 %v307, %v596
    %v598 = vpop.f32.mrb[0].mxu0
    %599 = vmatprep.mubr.bf16.mxu0 0
    %600 = vmatmul.mubr.bf16.gmra.mrb[0].mxu0 %v443
    %v601 = vpop.f32.mrb[0].mxu0
    %v602 = vadd.f32 %v307, %v601
    %v603 = vpop.f32.mrb[0].mxu0
    %v604 = vpop.f32.mrb[0].mxu0
    %v605 = vadd.f32 %v307, %v604
    %v606 = vpop.f32.mrb[0].mxu0
    %607 = vmatprep.mubr.bf16.mxu0 0
    %608 = vmatmul.mubr.bf16.gmra.mrb[0].mxu0 %v446
    %v609 = vpop.f32.mrb[0].mxu0
    %v610 = vadd.f32 %v307, %v609
    %v611 = vpop.f32.mrb[0].mxu0
    %v612 = vpop.f32.mrb[0].mxu0
    %v613 = vadd.f32 %v307, %v612
    %v614 = vpop.f32.mrb[0].mxu0
    %615 = vdwg.mxu0
    %v616 = vlaneseq
    %v617 = vshrl.u32 %v616, 7
    %v618 = vsub.s32 0, %v617
    %v619 = vrot.slane %v271, %v618
    %v620 = vmul.f32 %v490, %v619
    %v621 = vmul.f32 %v493, %v619
    %v622 = vmul.f32 %v498, %v619
    %v623 = vmul.f32 %v501, %v619
    %v624 = vmul.f32 %v506, %v619
    %v625 = vmul.f32 %v509, %v619
    %v626 = vmul.f32 %v514, %v619
    %v627 = vmul.f32 %v517, %v619
    %v628 = vmul.f32 %v522, %v619
    %v629 = vmul.f32 %v525, %v619
    %v630 = vmul.f32 %v530, %v619
    %v631 = vmul.f32 %v533, %v619
    %v632 = vmul.f32 %v538, %v619
    %v633 = vmul.f32 %v541, %v619
    %v634 = vmul.f32 %v546, %v619
    %v635 = vmul.f32 %v549, %v619
    %v636 = vmul.f32 %v554, %v619
    %v637 = vmul.f32 %v557, %v619
    %v638 = vmul.f32 %v562, %v619
    %v639 = vmul.f32 %v565, %v619
    %v640 = vmul.f32 %v570, %v619
    %v641 = vmul.f32 %v573, %v619
    %v642 = vmul.f32 %v578, %v619
    %v643 = vmul.f32 %v581, %v619
    %v644 = vmul.f32 %v586, %v619
    %v645 = vmul.f32 %v589, %v619
    %v646 = vmul.f32 %v594, %v619
    %v647 = vmul.f32 %v597, %v619
    %v648 = vmul.f32 %v602, %v619
    %v649 = vmul.f32 %v605, %v619
    %v650 = vmul.f32 %v610, %v619
    %v651 = vmul.f32 %v613, %v619
    %v652 = vlaneseq
    %v653 = vshrl.u32 %v652, 7
    %v654 = vsub.s32 0, %v653
    %v655 = vrot.slane %v181, %v654
    %v656 = vadd.f32 %v620, %v655
    %v657 = vadd.f32 %v621, %v655
    %v658 = vadd.f32 %v622, %v655
    %v659 = vadd.f32 %v623, %v655
    %v660 = vadd.f32 %v624, %v655
    %v661 = vadd.f32 %v625, %v655
    %v662 = vadd.f32 %v626, %v655
    %v663 = vadd.f32 %v627, %v655
    %v664 = vadd.f32 %v628, %v655
    %v665 = vadd.f32 %v629, %v655
    %v666 = vadd.f32 %v630, %v655
    %v667 = vadd.f32 %v631, %v655
    %v668 = vadd.f32 %v632, %v655
    %v669 = vadd.f32 %v633, %v655
    %v670 = vadd.f32 %v634, %v655
    %v671 = vadd.f32 %v635, %v655
    %v672 = vadd.f32 %v636, %v655
    %v673 = vadd.f32 %v637, %v655
    %v674 = vadd.f32 %v638, %v655
    %v675 = vadd.f32 %v639, %v655
    %v676 = vadd.f32 %v640, %v655
    %v677 = vadd.f32 %v641, %v655
    %v678 = vadd.f32 %v642, %v655
    %v679 = vadd.f32 %v643, %v655
    %v680 = vadd.f32 %v644, %v655
    %v681 = vadd.f32 %v645, %v655
    %v682 = vadd.f32 %v646, %v655
    %v683 = vadd.f32 %v647, %v655
    %v684 = vadd.f32 %v648, %v655
    %v685 = vadd.f32 %v649, %v655
    %v686 = vadd.f32 %v650, %v655
    %v687 = vadd.f32 %v651, %v655
    %v688 = vmax.f32 %v656, 0.0
    %v689 = vmax.f32 %v657, 0.0
    %v690 = vmax.f32 %v658, 0.0
    %v691 = vmax.f32 %v659, 0.0
    %v692 = vmax.f32 %v660, 0.0
    %v693 = vmax.f32 %v661, 0.0
    %v694 = vmax.f32 %v662, 0.0
    %v695 = vmax.f32 %v663, 0.0
    %v696 = vmax.f32 %v664, 0.0
    %v697 = vmax.f32 %v665, 0.0
    %v698 = vmax.f32 %v666, 0.0
    %v699 = vmax.f32 %v667, 0.0
    %v700 = vmax.f32 %v668, 0.0
    %v701 = vmax.f32 %v669, 0.0
    %v702 = vmax.f32 %v670, 0.0
    %v703 = vmax.f32 %v671, 0.0
    %v704 = vmax.f32 %v672, 0.0
    %v705 = vmax.f32 %v673, 0.0
    %v706 = vmax.f32 %v674, 0.0
    %v707 = vmax.f32 %v675, 0.0
    %v708 = vmax.f32 %v676, 0.0
    %v709 = vmax.f32 %v677, 0.0
    %v710 = vmax.f32 %v678, 0.0
    %v711 = vmax.f32 %v679, 0.0
    %v712 = vmax.f32 %v680, 0.0
    %v713 = vmax.f32 %v681, 0.0
    %v714 = vmax.f32 %v682, 0.0
    %v715 = vmax.f32 %v683, 0.0
    %v716 = vmax.f32 %v684, 0.0
    %v717 = vmax.f32 %v685, 0.0
    %v718 = vmax.f32 %v686, 0.0
    %v719 = vmax.f32 %v687, 0.0
    %720 = vmatprep.subr.mxu0 0.0
    %721 = vmatpush1.msra.mxu0 %v688
    %722 = vmatprep.subr.mxu0 0.0
    %723 = vmatpush1.msra.mxu0 %v689
    %724 = vmatprep.subr.mxu0 0.0
    %725 = vmatpush1.msra.mxu0 %v690
    %726 = vmatprep.subr.mxu0 0.0
    %727 = vmatpush1.msra.mxu0 %v691
    %728 = vmatprep.subr.mxu0 0.0
    %729 = vmatpush1.msra.mxu0 %v692
    %730 = vmatprep.subr.mxu0 0.0
    %731 = vmatpush1.msra.mxu0 %v693
    %732 = vmatprep.subr.mxu0 0.0
    %733 = vmatpush1.msra.mxu0 %v694
    %734 = vmatprep.subr.mxu0 0.0
    %735 = vmatpush1.msra.mxu0 %v695
    %736 = vmatprep.subr.mxu0 0.0
    %737 = vmatpush1.msra.mxu0 %v696
    %738 = vmatprep.subr.mxu0 0.0
    %739 = vmatpush1.msra.mxu0 %v697
    %740 = vmatprep.subr.mxu0 0.0
    %741 = vmatpush1.msra.mxu0 %v698
    %742 = vmatprep.subr.mxu0 0.0
    %743 = vmatpush1.msra.mxu0 %v699
    %744 = vmatprep.subr.mxu0 0.0
    %745 = vmatpush1.msra.mxu0 %v700
    %746 = vmatprep.subr.mxu0 0.0
    %747 = vmatpush1.msra.mxu0 %v701
    %748 = vmatprep.subr.mxu0 0.0
    %749 = vmatpush1.msra.mxu0 %v702
    %750 = vmatprep.subr.mxu0 0.0
    %751 = vmatpush1.msra.mxu0 %v703
    %752 = vmatprep.subr.mxu0 0.0
    %753 = vmatpush1.msra.mxu0 %v704
    %754 = vmatprep.subr.mxu0 0.0
    %755 = vmatpush1.msra.mxu0 %v705
    %756 = vmatprep.subr.mxu0 0.0
    %757 = vmatpush1.msra.mxu0 %v706
    %758 = vmatprep.subr.mxu0 0.0
    %759 = vmatpush1.msra.mxu0 %v707
    %760 = vmatprep.subr.mxu0 0.0
    %761 = vmatpush1.msra.mxu0 %v708
    %762 = vmatprep.subr.mxu0 0.0
    %763 = vmatpush1.msra.mxu0 %v709
    %764 = vmatprep.subr.mxu0 0.0
    %765 = vmatpush1.msra.mxu0 %v710
    %766 = vmatprep.subr.mxu0 0.0
    %767 = vmatpush1.msra.mxu0 %v711
    %768 = vmatprep.subr.mxu0 0.0
    %769 = vmatpush1.msra.mxu0 %v712
    %770 = vmatprep.subr.mxu0 0.0
    %771 = vmatpush1.msra.mxu0 %v713
    %772 = vmatprep.subr.mxu0 0.0
    %773 = vmatpush1.msra.mxu0 %v714
    %774 = vmatprep.subr.mxu0 0.0
    %775 = vmatpush1.msra.mxu0 %v715
    %776 = vmatprep.subr.mxu0 0.0
    %777 = vmatpush1.msra.mxu0 %v716
    %778 = vmatprep.subr.mxu0 0.0
    %779 = vmatpush1.msra.mxu0 %v717
    %780 = vmatprep.subr.mxu0 0.0
    %781 = vmatpush1.msra.mxu0 %v718
    %782 = vmatprep.subr.mxu0 0.0
    %783 = vmatpush1.msra.mxu0 %v719
    %784 = vmatprep.mubr.f32.mxu0 0.00390625
    %785 = vmatmul.mubr.f32.gmra.mrb[0].mxu0 0.00390625
    %v786 = vpop.f32.mrb[0].mxu0
    %v787 = vadd.f32 0.0, %v786
    %v788 = vpop.f32.mrb[0].mxu0
    %789 = vdwg.mxu0
    %v790 = vld [vmem:[%s3 + $0x58] sm:$0xff]
    %v791 = vld [vmem:[%s3 + $0x60] sm:$0xff]
    %v792 = vld [vmem:[%s3 + $0x68] sm:$0xff]
    %v793 = vld [vmem:[%s3 + $0x70] sm:$0xff]
    %v795 = vsel %vm31, %v787, 0
    %797 = vmatprep.subr.mxu0 0.0
    %798 = vmatpush1.msra.mxu0 %v790
    %799 = vmatprep.subr.mxu0 0.0
    %800 = vmatpush1.msra.mxu0 %v791
    %801 = vmatprep.subr.mxu0 0.0
    %802 = vmatpush1.msra.mxu0 %v792
    %803 = vmatprep.subr.mxu0 0.0
    %804 = vmatpush1.msra.mxu0 %v793
    %805 = vmatprep.subr.mxu0 0.0
    %806 = vmatpush1.msra.mxu0 0.0
    %807 = vmatprep.subr.mxu0 0.0
    %808 = vmatpush1.msra.mxu0 0.0
    %809 = vmatprep.subr.mxu0 0.0
    %810 = vmatpush1.msra.mxu0 0.0
    %811 = vmatprep.subr.mxu0 0.0
    %812 = vmatpush1.msra.mxu0 0.0
    %813 = vmatprep.subr.mxu0 0.0
    %814 = vmatpush1.msra.mxu0 0.0
    %815 = vmatprep.subr.mxu0 0.0
    %816 = vmatpush1.msra.mxu0 0.0
    %817 = vmatprep.subr.mxu0 0.0
    %818 = vmatpush1.msra.mxu0 0.0
    %819 = vmatprep.subr.mxu0 0.0
    %820 = vmatpush1.msra.mxu0 0.0
    %821 = vmatprep.subr.mxu0 0.0
    %822 = vmatpush1.msra.mxu0 0.0
    %823 = vmatprep.subr.mxu0 0.0
    %824 = vmatpush1.msra.mxu0 0.0
    %825 = vmatprep.subr.mxu0 0.0
    %826 = vmatpush1.msra.mxu0 0.0
    %827 = vmatprep.subr.mxu0 0.0
    %828 = vmatpush1.msra.mxu0 0.0
    %829 = vmatprep.subr.mxu0 0.0
    %830 = vmatpush1.msra.mxu0 0.0
    %831 = vmatprep.subr.mxu0 0.0
    %832 = vmatpush1.msra.mxu0 0.0
    %833 = vmatprep.subr.mxu0 0.0
    %834 = vmatpush1.msra.mxu0 0.0
    %835 = vmatprep.subr.mxu0 0.0
    %836 = vmatpush1.msra.mxu0 0.0
    %837 = vmatprep.subr.mxu0 0.0
    %838 = vmatpush1.msra.mxu0 0.0
    %839 = vmatprep.subr.mxu0 0.0
    %840 = vmatpush1.msra.mxu0 0.0
    %841 = vmatprep.subr.mxu0 0.0
    %842 = vmatpush1.msra.mxu0 0.0
    %843 = vmatprep.subr.mxu0 0.0
    %844 = vmatpush1.msra.mxu0 0.0
    %845 = vmatprep.subr.mxu0 0.0
    %846 = vmatpush1.msra.mxu0 0.0
    %847 = vmatprep.subr.mxu0 0.0
    %848 = vmatpush1.msra.mxu0 0.0
    %849 = vmatprep.subr.mxu0 0.0
    %850 = vmatpush1.msra.mxu0 0.0
    %851 = vmatprep.subr.mxu0 0.0
    %852 = vmatpush1.msra.mxu0 0.0
    %853 = vmatprep.subr.mxu0 0.0
    %854 = vmatpush1.msra.mxu0 0.0
    %855 = vmatprep.subr.mxu0 0.0
    %856 = vmatpush1.msra.mxu0 0.0
    %857 = vmatprep.subr.mxu0 0.0
    %858 = vmatpush1.msra.mxu0 0.0
    %859 = vmatprep.subr.mxu0 0.0
    %860 = vmatpush1.msra.mxu0 0.0
    %861 = vmatprep.mubr.f32.mxu0 0.0
    %862 = vmatmul.mubr.f32.gmra.mrb[0].mxu0 %v795
    %v863 = vpop.f32.mrb[0].mxu0
    %v864 = vadd.f32 0.0, %v863
    %v865 = vpop.f32.mrb[0].mxu0
    %866 = vdwg.mxu0
    %v867 = vadd.f32 %v268, %v864
    %v868 = vld [vmem:[%s1 + $0x80] sm:$0xf]
    %v869 = vld [vmem:[%s1 + $0x84] sm:$0xf]
    %v870 = vld [vmem:[%s1 + $0x88] sm:$0xf]
    %v871 = vld [vmem:[%s1 + $0x8c] sm:$0xf]
    %v872 = vld [vmem:[%s1 + $0x90] sm:$0xf]
    %v873 = vld [vmem:[%s1 + $0x94] sm:$0xf]
    %v874 = vld [vmem:[%s1 + $0x98] sm:$0xf]
    %v875 = vld [vmem:[%s1 + $0x9c] sm:$0xf]
    %v876 = vld [vmem:[%s1 + $0xa0] sm:$0xf]
    %v877 = vld [vmem:[%s1 + $0xa4] sm:$0xf]
    %v878 = vld [vmem:[%s1 + $0xa8] sm:$0xf]
    %v879 = vld [vmem:[%s1 + $0xac] sm:$0xf]
    %v880 = vld [vmem:[%s1 + $0xb0] sm:$0xf]
    %v881 = vld [vmem:[%s1 + $0xb4] sm:$0xf]
    %v882 = vld [vmem:[%s1 + $0xb8] sm:$0xf]
    %v883 = vld [vmem:[%s1 + $0xbc] sm:$0xf]
    %v884 = vld [vmem:[%s1 + $0xc0] sm:$0xf]
    %v885 = vld [vmem:[%s1 + $0xc4] sm:$0xf]
    %v886 = vld [vmem:[%s1 + $0xc8] sm:$0xf]
    %v887 = vld [vmem:[%s1 + $0xcc] sm:$0xf]
    %v888 = vld [vmem:[%s1 + $0xd0] sm:$0xf]
    %v889 = vld [vmem:[%s1 + $0xd4] sm:$0xf]
    %v890 = vld [vmem:[%s1 + $0xd8] sm:$0xf]
    %v891 = vld [vmem:[%s1 + $0xdc] sm:$0xf]
    %v892 = vld [vmem:[%s1 + $0xe0] sm:$0xf]
    %v893 = vld [vmem:[%s1 + $0xe4] sm:$0xf]
    %v894 = vld [vmem:[%s1 + $0xe8] sm:$0xf]
    %v895 = vld [vmem:[%s1 + $0xec] sm:$0xf]
    %v896 = vld [vmem:[%s1 + $0xf0] sm:$0xf]
    %v897 = vld [vmem:[%s1 + $0xf4] sm:$0xf]
    %v898 = vld [vmem:[%s1 + $0xf8] sm:$0xf]
    %v899 = vld [vmem:[%s1 + $0xfc] sm:$0xf]
    %v932 = vunpack.c.l.b16 %v868
    %v933 = vunpack.c.l.b16 %v869
    %v934 = vunpack.c.l.b16 %v870
    %v935 = vunpack.c.l.b16 %v871
    %v936 = vunpack.c.l.b16 %v872
    %v937 = vunpack.c.l.b16 %v873
    %v938 = vunpack.c.l.b16 %v874
    %v939 = vunpack.c.l.b16 %v875
    %v940 = vunpack.c.l.b16 %v876
    %v941 = vunpack.c.l.b16 %v877
    %v942 = vunpack.c.l.b16 %v878
    %v943 = vunpack.c.l.b16 %v879
    %v944 = vunpack.c.l.b16 %v880
    %v945 = vunpack.c.l.b16 %v881
    %v946 = vunpack.c.l.b16 %v882
    %v947 = vunpack.c.l.b16 %v883
    %v948 = vunpack.c.l.b16 %v884
    %v949 = vunpack.c.l.b16 %v885
    %v950 = vunpack.c.l.b16 %v886
    %v951 = vunpack.c.l.b16 %v887
    %v952 = vunpack.c.l.b16 %v888
    %v953 = vunpack.c.l.b16 %v889
    %v954 = vunpack.c.l.b16 %v890
    %v955 = vunpack.c.l.b16 %v891
    %v956 = vunpack.c.l.b16 %v892
    %v957 = vunpack.c.l.b16 %v893
    %v958 = vunpack.c.l.b16 %v894
    %v959 = vunpack.c.l.b16 %v895
    %v960 = vunpack.c.l.b16 %v896
    %v961 = vunpack.c.l.b16 %v897
    %v962 = vunpack.c.l.b16 %v898
    %v963 = vunpack.c.l.b16 %v899
    %v964 = vpack.c.b16 %v933, %v932
    %v965 = vpack.c.b16 %v935, %v934
    %v966 = vpack.c.b16 %v937, %v936
    %v967 = vpack.c.b16 %v939, %v938
    %v968 = vpack.c.b16 %v941, %v940
    %v969 = vpack.c.b16 %v943, %v942
    %v970 = vpack.c.b16 %v945, %v944
    %v971 = vpack.c.b16 %v947, %v946
    %v972 = vpack.c.b16 %v949, %v948
    %v973 = vpack.c.b16 %v951, %v950
    %v974 = vpack.c.b16 %v953, %v952
    %v975 = vpack.c.b16 %v955, %v954
    %v976 = vpack.c.b16 %v957, %v956
    %v977 = vpack.c.b16 %v959, %v958
    %v978 = vpack.c.b16 %v961, %v960
    %v979 = vpack.c.b16 %v963, %v962
    %v981 = vsel %vm399, %v964, 0
    %v984 = vsel %vm399, %v965, 0
    %v987 = vsel %vm399, %v966, 0
    %v990 = vsel %vm399, %v967, 0
    %v993 = vsel %vm399, %v968, 0
    %v996 = vsel %vm399, %v969, 0
    %v999 = vsel %vm399, %v970, 0
    %v1002 = vsel %vm399, %v971, 0
    %v1005 = vsel %vm399, %v972, 0
    %v1008 = vsel %vm399, %v973, 0
    %v1011 = vsel %vm399, %v974, 0
    %v1014 = vsel %vm399, %v975, 0
    %v1017 = vsel %vm399, %v976, 0
    %v1020 = vsel %vm399, %v977, 0
    %v1023 = vsel %vm399, %v978, 0
    %v1026 = vsel %vm399, %v979, 0
    %1028 = vmatprep.subr.bf16.mxu0 0
    %1029 = vmatpush1.bf16.msra.mxu0 %v396
    %1030 = vmatprep.subr.bf16.mxu0 0
    %1031 = vmatpush1.bf16.msra.mxu0 %v453
    %1032 = vmatprep.subr.bf16.mxu0 0
    %1033 = vmatpush1.bf16.msra.mxu0 0
    %1034 = vmatprep.subr.bf16.mxu0 0
    %1035 = vmatpush1.bf16.msra.mxu0 0
    %1036 = vmatprep.subr.bf16.mxu0 0
    %1037 = vmatpush1.bf16.msra.mxu0 0
    %1038 = vmatprep.subr.bf16.mxu0 0
    %1039 = vmatpush1.bf16.msra.mxu0 0
    %1040 = vmatprep.subr.bf16.mxu0 0
    %1041 = vmatpush1.bf16.msra.mxu0 0
    %1042 = vmatprep.subr.bf16.mxu0 0
    %1043 = vmatpush1.bf16.msra.mxu0 0
    %1044 = vmatprep.subr.bf16.mxu0 0
    %1045 = vmatpush1.bf16.msra.mxu0 0
    %1046 = vmatprep.subr.bf16.mxu0 0
    %1047 = vmatpush1.bf16.msra.mxu0 0
    %1048 = vmatprep.subr.bf16.mxu0 0
    %1049 = vmatpush1.bf16.msra.mxu0 0
    %1050 = vmatprep.subr.bf16.mxu0 0
    %1051 = vmatpush1.bf16.msra.mxu0 0
    %1052 = vmatprep.subr.bf16.mxu0 0
    %1053 = vmatpush1.bf16.msra.mxu0 0
    %1054 = vmatprep.subr.bf16.mxu0 0
    %1055 = vmatpush1.bf16.msra.mxu0 0
    %1056 = vmatprep.subr.bf16.mxu0 0
    %1057 = vmatpush1.bf16.msra.mxu0 0
    %1058 = vmatprep.subr.bf16.mxu0 0
    %1059 = vmatpush1.bf16.msra.mxu0 0
    %1060 = vmatprep.mubr.bf16.mxu0 0
    %1061 = vmatmul.mubr.bf16.gmra.mrb[0].mxu0 %v981
    %v1062 = vpop.f32.mrb[0].mxu0
    %v1063 = vadd.f32 %v307, %v1062
    %v1064 = vpop.f32.mrb[0].mxu0
    %v1065 = vpop.f32.mrb[0].mxu0
    %v1066 = vadd.f32 %v307, %v1065
    %v1067 = vpop.f32.mrb[0].mxu0
    %1068 = vmatprep.mubr.bf16.mxu0 0
    %1069 = vmatmul.mubr.bf16.gmra.mrb[0].mxu0 %v984
    %v1070 = vpop.f32.mrb[0].mxu0
    %v1071 = vadd.f32 %v307, %v1070
    %v1072 = vpop.f32.mrb[0].mxu0
    %v1073 = vpop.f32.mrb[0].mxu0
    %v1074 = vadd.f32 %v307, %v1073
    %v1075 = vpop.f32.mrb[0].mxu0
    %1076 = vmatprep.mubr.bf16.mxu0 0
    %1077 = vmatmul.mubr.bf16.gmra.mrb[0].mxu0 %v987
    %v1078 = vpop.f32.mrb[0].mxu0
    %v1079 = vadd.f32 %v307, %v1078
    %v1080 = vpop.f32.mrb[0].mxu0
    %v1081 = vpop.f32.mrb[0].mxu0
    %v1082 = vadd.f32 %v307, %v1081
    %v1083 = vpop.f32.mrb[0].mxu0
    %1084 = vmatprep.mubr.bf16.mxu0 0
    %1085 = vmatmul.mubr.bf16.gmra.mrb[0].mxu0 %v990
    %v1086 = vpop.f32.mrb[0].mxu0
    %v1087 = vadd.f32 %v307, %v1086
    %v1088 = vpop.f32.mrb[0].mxu0
    %v1089 = vpop.f32.mrb[0].mxu0
    %v1090 = vadd.f32 %v307, %v1089
    %v1091 = vpop.f32.mrb[0].mxu0
    %1092 = vmatprep.mubr.bf16.mxu0 0
    %1093 = vmatmul.mubr.bf16.gmra.mrb[0].mxu0 %v993
    %v1094 = vpop.f32.mrb[0].mxu0
    %v1095 = vadd.f32 %v307, %v1094
    %v1096 = vpop.f32.mrb[0].mxu0
    %v1097 = vpop.f32.mrb[0].mxu0
    %v1098 = vadd.f32 %v307, %v1097
    %v1099 = vpop.f32.mrb[0].mxu0
    %1100 = vmatprep.mubr.bf16.mxu0 0
    %1101 = vmatmul.mubr.bf16.gmra.mrb[0].mxu0 %v996
    %v1102 = vpop.f32.mrb[0].mxu0
    %v1103 = vadd.f32 %v307, %v1102
    %v1104 = vpop.f32.mrb[0].mxu0
    %v1105 = vpop.f32.mrb[0].mxu0
    %v1106 = vadd.f32 %v307, %v1105
    %v1107 = vpop.f32.mrb[0].mxu0
    %1108 = vmatprep.mubr.bf16.mxu0 0
    %1109 = vmatmul.mubr.bf16.gmra.mrb[0].mxu0 %v999
    %v1110 = vpop.f32.mrb[0].mxu0
    %v1111 = vadd.f32 %v307, %v1110
    %v1112 = vpop.f32.mrb[0].mxu0
    %v1113 = vpop.f32.mrb[0].mxu0
    %v1114 = vadd.f32 %v307, %v1113
    %v1115 = vpop.f32.mrb[0].mxu0
    %1116 = vmatprep.mubr.bf16.mxu0 0
    %1117 = vmatmul.mubr.bf16.gmra.mrb[0].mxu0 %v1002
    %v1118 = vpop.f32.mrb[0].mxu0
    %v1119 = vadd.f32 %v307, %v1118
    %v1120 = vpop.f32.mrb[0].mxu0
    %v1121 = vpop.f32.mrb[0].mxu0
    %v1122 = vadd.f32 %v307, %v1121
    %v1123 = vpop.f32.mrb[0].mxu0
    %1124 = vmatprep.mubr.bf16.mxu0 0
    %1125 = vmatmul.mubr.bf16.gmra.mrb[0].mxu0 %v1005
    %v1126 = vpop.f32.mrb[0].mxu0
    %v1127 = vadd.f32 %v307, %v1126
    %v1128 = vpop.f32.mrb[0].mxu0
    %v1129 = vpop.f32.mrb[0].mxu0
    %v1130 = vadd.f32 %v307, %v1129
    %v1131 = vpop.f32.mrb[0].mxu0
    %1132 = vmatprep.mubr.bf16.mxu0 0
    %1133 = vmatmul.mubr.bf16.gmra.mrb[0].mxu0 %v1008
    %v1134 = vpop.f32.mrb[0].mxu0
    %v1135 = vadd.f32 %v307, %v1134
    %v1136 = vpop.f32.mrb[0].mxu0
    %v1137 = vpop.f32.mrb[0].mxu0
    %v1138 = vadd.f32 %v307, %v1137
    %v1139 = vpop.f32.mrb[0].mxu0
    %1140 = vmatprep.mubr.bf16.mxu0 0
    %1141 = vmatmul.mubr.bf16.gmra.mrb[0].mxu0 %v1011
    %v1142 = vpop.f32.mrb[0].mxu0
    %v1143 = vadd.f32 %v307, %v1142
    %v1144 = vpop.f32.mrb[0].mxu0
    %v1145 = vpop.f32.mrb[0].mxu0
    %v1146 = vadd.f32 %v307, %v1145
    %v1147 = vpop.f32.mrb[0].mxu0
    %1148 = vmatprep.mubr.bf16.mxu0 0
    %1149 = vmatmul.mubr.bf16.gmra.mrb[0].mxu0 %v1014
    %v1150 = vpop.f32.mrb[0].mxu0
    %v1151 = vadd.f32 %v307, %v1150
    %v1152 = vpop.f32.mrb[0].mxu0
    %v1153 = vpop.f32.mrb[0].mxu0
    %v1154 = vadd.f32 %v307, %v1153
    %v1155 = vpop.f32.mrb[0].mxu0
    %1156 = vmatprep.mubr.bf16.mxu0 0
    %1157 = vmatmul.mubr.bf16.gmra.mrb[0].mxu0 %v1017
    %v1158 = vpop.f32.mrb[0].mxu0
    %v1159 = vadd.f32 %v307, %v1158
    %v1160 = vpop.f32.mrb[0].mxu0
    %v1161 = vpop.f32.mrb[0].mxu0
    %v1162 = vadd.f32 %v307, %v1161
    %v1163 = vpop.f32.mrb[0].mxu0
    %1164 = vmatprep.mubr.bf16.mxu0 0
    %1165 = vmatmul.mubr.bf16.gmra.mrb[0].mxu0 %v1020
    %v1166 = vpop.f32.mrb[0].mxu0
    %v1167 = vadd.f32 %v307, %v1166
    %v1168 = vpop.f32.mrb[0].mxu0
    %v1169 = vpop.f32.mrb[0].mxu0
    %v1170 = vadd.f32 %v307, %v1169
    %v1171 = vpop.f32.mrb[0].mxu0
    %1172 = vmatprep.mubr.bf16.mxu0 0
    %1173 = vmatmul.mubr.bf16.gmra.mrb[0].mxu0 %v1023
    %v1174 = vpop.f32.mrb[0].mxu0
    %v1175 = vadd.f32 %v307, %v1174
    %v1176 = vpop.f32.mrb[0].mxu0
    %v1177 = vpop.f32.mrb[0].mxu0
    %v1178 = vadd.f32 %v307, %v1177
    %v1179 = vpop.f32.mrb[0].mxu0
    %1180 = vmatprep.mubr.bf16.mxu0 0
    %1181 = vmatmul.mubr.bf16.gmra.mrb[0].mxu0 %v1026
    %v1182 = vpop.f32.mrb[0].mxu0
    %v1183 = vadd.f32 %v307, %v1182
    %v1184 = vpop.f32.mrb[0].mxu0
    %v1185 = vpop.f32.mrb[0].mxu0
    %v1186 = vadd.f32 %v307, %v1185
    %v1187 = vpop.f32.mrb[0].mxu0
    %1188 = vdwg.mxu0
    %v1189 = vmul.f32 %v1063, %v619
    %v1190 = vmul.f32 %v1066, %v619
    %v1191 = vmul.f32 %v1071, %v619
    %v1192 = vmul.f32 %v1074, %v619
    %v1193 = vmul.f32 %v1079, %v619
    %v1194 = vmul.f32 %v1082, %v619
    %v1195 = vmul.f32 %v1087, %v619
    %v1196 = vmul.f32 %v1090, %v619
    %v1197 = vmul.f32 %v1095, %v619
    %v1198 = vmul.f32 %v1098, %v619
    %v1199 = vmul.f32 %v1103, %v619
    %v1200 = vmul.f32 %v1106, %v619
    %v1201 = vmul.f32 %v1111, %v619
    %v1202 = vmul.f32 %v1114, %v619
    %v1203 = vmul.f32 %v1119, %v619
    %v1204 = vmul.f32 %v1122, %v619
    %v1205 = vmul.f32 %v1127, %v619
    %v1206 = vmul.f32 %v1130, %v619
    %v1207 = vmul.f32 %v1135, %v619
    %v1208 = vmul.f32 %v1138, %v619
    %v1209 = vmul.f32 %v1143, %v619
    %v1210 = vmul.f32 %v1146, %v619
    %v1211 = vmul.f32 %v1151, %v619
    %v1212 = vmul.f32 %v1154, %v619
    %v1213 = vmul.f32 %v1159, %v619
    %v1214 = vmul.f32 %v1162, %v619
    %v1215 = vmul.f32 %v1167, %v619
    %v1216 = vmul.f32 %v1170, %v619
    %v1217 = vmul.f32 %v1175, %v619
    %v1218 = vmul.f32 %v1178, %v619
    %v1219 = vmul.f32 %v1183, %v619
    %v1220 = vmul.f32 %v1186, %v619
    %v1221 = vadd.f32 %v1189, %v655
    %v1222 = vadd.f32 %v1190, %v655
    %v1223 = vadd.f32 %v1191, %v655
    %v1224 = vadd.f32 %v1192, %v655
    %v1225 = vadd.f32 %v1193, %v655
    %v1226 = vadd.f32 %v1194, %v655
    %v1227 = vadd.f32 %v1195, %v655
    %v1228 = vadd.f32 %v1196, %v655
    %v1229 = vadd.f32 %v1197, %v655
    %v1230 = vadd.f32 %v1198, %v655
    %v1231 = vadd.f32 %v1199, %v655
    %v1232 = vadd.f32 %v1200, %v655
    %v1233 = vadd.f32 %v1201, %v655
    %v1234 = vadd.f32 %v1202, %v655
    %v1235 = vadd.f32 %v1203, %v655
    %v1236 = vadd.f32 %v1204, %v655
    %v1237 = vadd.f32 %v1205, %v655
    %v1238 = vadd.f32 %v1206, %v655
    %v1239 = vadd.f32 %v1207, %v655
    %v1240 = vadd.f32 %v1208, %v655
    %v1241 = vadd.f32 %v1209, %v655
    %v1242 = vadd.f32 %v1210, %v655
    %v1243 = vadd.f32 %v1211, %v655
    %v1244 = vadd.f32 %v1212, %v655
    %v1245 = vadd.f32 %v1213, %v655
    %v1246 = vadd.f32 %v1214, %v655
    %v1247 = vadd.f32 %v1215, %v655
    %v1248 = vadd.f32 %v1216, %v655
    %v1249 = vadd.f32 %v1217, %v655
    %v1250 = vadd.f32 %v1218, %v655
    %v1251 = vadd.f32 %v1219, %v655
    %v1252 = vadd.f32 %v1220, %v655
    %v1253 = vmax.f32 %v1221, 0.0
    %v1254 = vmax.f32 %v1222, 0.0
    %v1255 = vmax.f32 %v1223, 0.0
    %v1256 = vmax.f32 %v1224, 0.0
    %v1257 = vmax.f32 %v1225, 0.0
    %v1258 = vmax.f32 %v1226, 0.0
    %v1259 = vmax.f32 %v1227, 0.0
    %v1260 = vmax.f32 %v1228, 0.0
    %v1261 = vmax.f32 %v1229, 0.0
    %v1262 = vmax.f32 %v1230, 0.0
    %v1263 = vmax.f32 %v1231, 0.0
    %v1264 = vmax.f32 %v1232, 0.0
    %v1265 = vmax.f32 %v1233, 0.0
    %v1266 = vmax.f32 %v1234, 0.0
    %v1267 = vmax.f32 %v1235, 0.0
    %v1268 = vmax.f32 %v1236, 0.0
    %v1269 = vmax.f32 %v1237, 0.0
    %v1270 = vmax.f32 %v1238, 0.0
    %v1271 = vmax.f32 %v1239, 0.0
    %v1272 = vmax.f32 %v1240, 0.0
    %v1273 = vmax.f32 %v1241, 0.0
    %v1274 = vmax.f32 %v1242, 0.0
    %v1275 = vmax.f32 %v1243, 0.0
    %v1276 = vmax.f32 %v1244, 0.0
    %v1277 = vmax.f32 %v1245, 0.0
    %v1278 = vmax.f32 %v1246, 0.0
    %v1279 = vmax.f32 %v1247, 0.0
    %v1280 = vmax.f32 %v1248, 0.0
    %v1281 = vmax.f32 %v1249, 0.0
    %v1282 = vmax.f32 %v1250, 0.0
    %v1283 = vmax.f32 %v1251, 0.0
    %v1284 = vmax.f32 %v1252, 0.0
    %1285 = vmatprep.subr.mxu0 0.0
    %1286 = vmatpush1.msra.mxu0 %v1253
    %1287 = vmatprep.subr.mxu0 0.0
    %1288 = vmatpush1.msra.mxu0 %v1254
    %1289 = vmatprep.subr.mxu0 0.0
    %1290 = vmatpush1.msra.mxu0 %v1255
    %1291 = vmatprep.subr.mxu0 0.0
    %1292 = vmatpush1.msra.mxu0 %v1256
    %1293 = vmatprep.subr.mxu0 0.0
    %1294 = vmatpush1.msra.mxu0 %v1257
    %1295 = vmatprep.subr.mxu0 0.0
    %1296 = vmatpush1.msra.mxu0 %v1258
    %1297 = vmatprep.subr.mxu0 0.0
    %1298 = vmatpush1.msra.mxu0 %v1259
    %1299 = vmatprep.subr.mxu0 0.0
    %1300 = vmatpush1.msra.mxu0 %v1260
    %1301 = vmatprep.subr.mxu0 0.0
    %1302 = vmatpush1.msra.mxu0 %v1261
    %1303 = vmatprep.subr.mxu0 0.0
    %1304 = vmatpush1.msra.mxu0 %v1262
    %1305 = vmatprep.subr.mxu0 0.0
    %1306 = vmatpush1.msra.mxu0 %v1263
    %1307 = vmatprep.subr.mxu0 0.0
    %1308 = vmatpush1.msra.mxu0 %v1264
    %1309 = vmatprep.subr.mxu0 0.0
    %1310 = vmatpush1.msra.mxu0 %v1265
    %1311 = vmatprep.subr.mxu0 0.0
    %1312 = vmatpush1.msra.mxu0 %v1266
    %1313 = vmatprep.subr.mxu0 0.0
    %1314 = vmatpush1.msra.mxu0 %v1267
    %1315 = vmatprep.subr.mxu0 0.0
    %1316 = vmatpush1.msra.mxu0 %v1268
    %1317 = vmatprep.subr.mxu0 0.0
    %1318 = vmatpush1.msra.mxu0 %v1269
    %1319 = vmatprep.subr.mxu0 0.0
    %1320 = vmatpush1.msra.mxu0 %v1270
    %1321 = vmatprep.subr.mxu0 0.0
    %1322 = vmatpush1.msra.mxu0 %v1271
    %1323 = vmatprep.subr.mxu0 0.0
    %1324 = vmatpush1.msra.mxu0 %v1272
    %1325 = vmatprep.subr.mxu0 0.0
    %1326 = vmatpush1.msra.mxu0 %v1273
    %1327 = vmatprep.subr.mxu0 0.0
    %1328 = vmatpush1.msra.mxu0 %v1274
    %1329 = vmatprep.subr.mxu0 0.0
    %1330 = vmatpush1.msra.mxu0 %v1275
    %1331 = vmatprep.subr.mxu0 0.0
    %1332 = vmatpush1.msra.mxu0 %v1276
    %1333 = vmatprep.subr.mxu0 0.0
    %1334 = vmatpush1.msra.mxu0 %v1277
    %1335 = vmatprep.subr.mxu0 0.0
    %1336 = vmatpush1.msra.mxu0 %v1278
    %1337 = vmatprep.subr.mxu0 0.0
    %1338 = vmatpush1.msra.mxu0 %v1279
    %1339 = vmatprep.subr.mxu0 0.0
    %1340 = vmatpush1.msra.mxu0 %v1280
    %1341 = vmatprep.subr.mxu0 0.0
    %1342 = vmatpush1.msra.mxu0 %v1281
    %1343 = vmatprep.subr.mxu0 0.0
    %1344 = vmatpush1.msra.mxu0 %v1282
    %1345 = vmatprep.subr.mxu0 0.0
    %1346 = vmatpush1.msra.mxu0 %v1283
    %1347 = vmatprep.subr.mxu0 0.0
    %1348 = vmatpush1.msra.mxu0 %v1284
    %1349 = vmatprep.mubr.f32.mxu0 0.00390625
    %1350 = vmatmul.mubr.f32.gmra.mrb[0].mxu0 0.00390625
    %v1351 = vpop.f32.mrb[0].mxu0
    %v1352 = vadd.f32 0.0, %v1351
    %v1353 = vpop.f32.mrb[0].mxu0
    %1354 = vdwg.mxu0
    %v1355 = vld [vmem:[%s3 + $0x78] sm:$0xff]
    %v1356 = vld [vmem:[%s3 + $0x80] sm:$0xff]
    %v1357 = vld [vmem:[%s3 + $0x88] sm:$0xff]
    %v1358 = vld [vmem:[%s3 + $0x90] sm:$0xff]
    %v1360 = vsel %vm31, %v1352, 0
    %1362 = vmatprep.subr.mxu0 0.0
    %1363 = vmatpush1.msra.mxu0 %v1355
    %1364 = vmatprep.subr.mxu0 0.0
    %1365 = vmatpush1.msra.mxu0 %v1356
    %1366 = vmatprep.subr.mxu0 0.0
    %1367 = vmatpush1.msra.mxu0 %v1357
    %1368 = vmatprep.subr.mxu0 0.0
    %1369 = vmatpush1.msra.mxu0 %v1358
    %1370 = vmatprep.subr.mxu0 0.0
    %1371 = vmatpush1.msra.mxu0 0.0
    %1372 = vmatprep.subr.mxu0 0.0
    %1373 = vmatpush1.msra.mxu0 0.0
    %1374 = vmatprep.subr.mxu0 0.0
    %1375 = vmatpush1.msra.mxu0 0.0
    %1376 = vmatprep.subr.mxu0 0.0
    %1377 = vmatpush1.msra.mxu0 0.0
    %1378 = vmatprep.subr.mxu0 0.0
    %1379 = vmatpush1.msra.mxu0 0.0
    %1380 = vmatprep.subr.mxu0 0.0
    %1381 = vmatpush1.msra.mxu0 0.0
    %1382 = vmatprep.subr.mxu0 0.0
    %1383 = vmatpush1.msra.mxu0 0.0
    %1384 = vmatprep.subr.mxu0 0.0
    %1385 = vmatpush1.msra.mxu0 0.0
    %1386 = vmatprep.subr.mxu0 0.0
    %1387 = vmatpush1.msra.mxu0 0.0
    %1388 = vmatprep.subr.mxu0 0.0
    %1389 = vmatpush1.msra.mxu0 0.0
    %1390 = vmatprep.subr.mxu0 0.0
    %1391 = vmatpush1.msra.mxu0 0.0
    %1392 = vmatprep.subr.mxu0 0.0
    %1393 = vmatpush1.msra.mxu0 0.0
    %1394 = vmatprep.subr.mxu0 0.0
    %1395 = vmatpush1.msra.mxu0 0.0
    %1396 = vmatprep.subr.mxu0 0.0
    %1397 = vmatpush1.msra.mxu0 0.0
    %1398 = vmatprep.subr.mxu0 0.0
    %1399 = vmatpush1.msra.mxu0 0.0
    %1400 = vmatprep.subr.mxu0 0.0
    %1401 = vmatpush1.msra.mxu0 0.0
    %1402 = vmatprep.subr.mxu0 0.0
    %1403 = vmatpush1.msra.mxu0 0.0
    %1404 = vmatprep.subr.mxu0 0.0
    %1405 = vmatpush1.msra.mxu0 0.0
    %1406 = vmatprep.subr.mxu0 0.0
    %1407 = vmatpush1.msra.mxu0 0.0
    %1408 = vmatprep.subr.mxu0 0.0
    %1409 = vmatpush1.msra.mxu0 0.0
    %1410 = vmatprep.subr.mxu0 0.0
    %1411 = vmatpush1.msra.mxu0 0.0
    %1412 = vmatprep.subr.mxu0 0.0
    %1413 = vmatpush1.msra.mxu0 0.0
    %1414 = vmatprep.subr.mxu0 0.0
    %1415 = vmatpush1.msra.mxu0 0.0
    %1416 = vmatprep.subr.mxu0 0.0
    %1417 = vmatpush1.msra.mxu0 0.0
    %1418 = vmatprep.subr.mxu0 0.0
    %1419 = vmatpush1.msra.mxu0 0.0
    %1420 = vmatprep.subr.mxu0 0.0
    %1421 = vmatpush1.msra.mxu0 0.0
    %1422 = vmatprep.subr.mxu0 0.0
    %1423 = vmatpush1.msra.mxu0 0.0
    %1424 = vmatprep.subr.mxu0 0.0
    %1425 = vmatpush1.msra.mxu0 0.0
    %1426 = vmatprep.mubr.f32.mxu0 0.0
    %1427 = vmatmul.mubr.f32.gmra.mrb[0].mxu0 %v1360
    %v1428 = vpop.f32.mrb[0].mxu0
    %v1429 = vadd.f32 0.0, %v1428
    %v1430 = vpop.f32.mrb[0].mxu0
    %1431 = vdwg.mxu0
    %v1432 = vadd.f32 %v867, %v1429
    %v1433 = vmax.f32 %v1432, 0.0
    %v1434 = vld [vmem:[%s1 + $0x100] sm:$0xf]
    %v1435 = vld [vmem:[%s1 + $0x104] sm:$0xf]
    %v1436 = vld [vmem:[%s1 + $0x108] sm:$0xf]
    %v1437 = vld [vmem:[%s1 + $0x10c] sm:$0xf]
    %v1438 = vld [vmem:[%s1 + $0x110] sm:$0xf]
    %v1439 = vld [vmem:[%s1 + $0x114] sm:$0xf]
    %v1440 = vld [vmem:[%s1 + $0x118] sm:$0xf]
    %v1441 = vld [vmem:[%s1 + $0x11c] sm:$0xf]
    %v1442 = vld [vmem:[%s1 + $0x120] sm:$0xf]
    %v1443 = vld [vmem:[%s1 + $0x124] sm:$0xf]
    %v1444 = vld [vmem:[%s1 + $0x128] sm:$0xf]
    %v1445 = vld [vmem:[%s1 + $0x12c] sm:$0xf]
    %v1446 = vld [vmem:[%s1 + $0x130] sm:$0xf]
    %v1447 = vld [vmem:[%s1 + $0x134] sm:$0xf]
    %v1448 = vld [vmem:[%s1 + $0x138] sm:$0xf]
    %v1449 = vld [vmem:[%s1 + $0x13c] sm:$0xf]
    %v1450 = vld [vmem:[%s1 + $0x140] sm:$0xf]
    %v1451 = vld [vmem:[%s1 + $0x144] sm:$0xf]
    %v1452 = vld [vmem:[%s1 + $0x148] sm:$0xf]
    %v1453 = vld [vmem:[%s1 + $0x14c] sm:$0xf]
    %v1454 = vld [vmem:[%s1 + $0x150] sm:$0xf]
    %v1455 = vld [vmem:[%s1 + $0x154] sm:$0xf]
    %v1456 = vld [vmem:[%s1 + $0x158] sm:$0xf]
    %v1457 = vld [vmem:[%s1 + $0x15c] sm:$0xf]
    %v1458 = vld [vmem:[%s1 + $0x160] sm:$0xf]
    %v1459 = vld [vmem:[%s1 + $0x164] sm:$0xf]
    %v1460 = vld [vmem:[%s1 + $0x168] sm:$0xf]
    %v1461 = vld [vmem:[%s1 + $0x16c] sm:$0xf]
    %v1462 = vld [vmem:[%s1 + $0x170] sm:$0xf]
    %v1463 = vld [vmem:[%s1 + $0x174] sm:$0xf]
    %v1464 = vld [vmem:[%s1 + $0x178] sm:$0xf]
    %v1465 = vld [vmem:[%s1 + $0x17c] sm:$0xf]
    %v1498 = vunpack.c.l.b16 %v1434
    %v1499 = vunpack.c.l.b16 %v1435
    %v1500 = vunpack.c.l.b16 %v1436
    %v1501 = vunpack.c.l.b16 %v1437
    %v1502 = vunpack.c.l.b16 %v1438
    %v1503 = vunpack.c.l.b16 %v1439
    %v1504 = vunpack.c.l.b16 %v1440
    %v1505 = vunpack.c.l.b16 %v1441
    %v1506 = vunpack.c.l.b16 %v1442
    %v1507 = vunpack.c.l.b16 %v1443
    %v1508 = vunpack.c.l.b16 %v1444
    %v1509 = vunpack.c.l.b16 %v1445
    %v1510 = vunpack.c.l.b16 %v1446
    %v1511 = vunpack.c.l.b16 %v1447
    %v1512 = vunpack.c.l.b16 %v1448
    %v1513 = vunpack.c.l.b16 %v1449
    %v1514 = vunpack.c.l.b16 %v1450
    %v1515 = vunpack.c.l.b16 %v1451
    %v1516 = vunpack.c.l.b16 %v1452
    %v1517 = vunpack.c.l.b16 %v1453
    %v1518 = vunpack.c.l.b16 %v1454
    %v1519 = vunpack.c.l.b16 %v1455
    %v1520 = vunpack.c.l.b16 %v1456
    %v1521 = vunpack.c.l.b16 %v1457
    %v1522 = vunpack.c.l.b16 %v1458
    %v1523 = vunpack.c.l.b16 %v1459
    %v1524 = vunpack.c.l.b16 %v1460
    %v1525 = vunpack.c.l.b16 %v1461
    %v1526 = vunpack.c.l.b16 %v1462
    %v1527 = vunpack.c.l.b16 %v1463
    %v1528 = vunpack.c.l.b16 %v1464
    %v1529 = vunpack.c.l.b16 %v1465
    %v1530 = vpack.c.b16 %v1499, %v1498
    %v1531 = vpack.c.b16 %v1501, %v1500
    %v1532 = vpack.c.b16 %v1503, %v1502
    %v1533 = vpack.c.b16 %v1505, %v1504
    %v1534 = vpack.c.b16 %v1507, %v1506
    %v1535 = vpack.c.b16 %v1509, %v1508
    %v1536 = vpack.c.b16 %v1511, %v1510
    %v1537 = vpack.c.b16 %v1513, %v1512
    %v1538 = vpack.c.b16 %v1515, %v1514
    %v1539 = vpack.c.b16 %v1517, %v1516
    %v1540 = vpack.c.b16 %v1519, %v1518
    %v1541 = vpack.c.b16 %v1521, %v1520
    %v1542 = vpack.c.b16 %v1523, %v1522
    %v1543 = vpack.c.b16 %v1525, %v1524
    %v1544 = vpack.c.b16 %v1527, %v1526
    %v1545 = vpack.c.b16 %v1529, %v1528
    %v1547 = vsel %vm399, %v1530, 0
    %v1550 = vsel %vm399, %v1531, 0
    %v1553 = vsel %vm399, %v1532, 0
    %v1556 = vsel %vm399, %v1533, 0
    %v1559 = vsel %vm399, %v1534, 0
    %v1562 = vsel %vm399, %v1535, 0
    %v1565 = vsel %vm399, %v1536, 0
    %v1568 = vsel %vm399, %v1537, 0
    %v1571 = vsel %vm399, %v1538, 0
    %v1574 = vsel %vm399, %v1539, 0
    %v1577 = vsel %vm399, %v1540, 0
    %v1580 = vsel %vm399, %v1541, 0
    %v1583 = vsel %vm399, %v1542, 0
    %v1586 = vsel %vm399, %v1543, 0
    %v1589 = vsel %vm399, %v1544, 0
    %v1592 = vsel %vm399, %v1545, 0
    %1594 = vmatprep.subr.bf16.mxu0 0
    %1595 = vmatpush1.bf16.msra.mxu0 %v396
    %1596 = vmatprep.subr.bf16.mxu0 0
    %1597 = vmatpush1.bf16.msra.mxu0 %v453
    %1598 = vmatprep.subr.bf16.mxu0 0
    %1599 = vmatpush1.bf16.msra.mxu0 0
    %1600 = vmatprep.subr.bf16.mxu0 0
    %1601 = vmatpush1.bf16.msra.mxu0 0
    %1602 = vmatprep.subr.bf16.mxu0 0
    %1603 = vmatpush1.bf16.msra.mxu0 0
    %1604 = vmatprep.subr.bf16.mxu0 0
    %1605 = vmatpush1.bf16.msra.mxu0 0
    %1606 = vmatprep.subr.bf16.mxu0 0
    %1607 = vmatpush1.bf16.msra.mxu0 0
    %1608 = vmatprep.subr.bf16.mxu0 0
    %1609 = vmatpush1.bf16.msra.mxu0 0
    %1610 = vmatprep.subr.bf16.mxu0 0
    %1611 = vmatpush1.bf16.msra.mxu0 0
    %1612 = vmatprep.subr.bf16.mxu0 0
    %1613 = vmatpush1.bf16.msra.mxu0 0
    %1614 = vmatprep.subr.bf16.mxu0 0
    %1615 = vmatpush1.bf16.msra.mxu0 0
    %1616 = vmatprep.subr.bf16.mxu0 0
    %1617 = vmatpush1.bf16.msra.mxu0 0
    %1618 = vmatprep.subr.bf16.mxu0 0
    %1619 = vmatpush1.bf16.msra.mxu0 0
    %1620 = vmatprep.subr.bf16.mxu0 0
    %1621 = vmatpush1.bf16.msra.mxu0 0
    %1622 = vmatprep.subr.bf16.mxu0 0
    %1623 = vmatpush1.bf16.msra.mxu0 0
    %1624 = vmatprep.subr.bf16.mxu0 0
    %1625 = vmatpush1.bf16.msra.mxu0 0
    %1626 = vmatprep.mubr.bf16.mxu0 0
    %1627 = vmatmul.mubr.bf16.gmra.mrb[0].mxu0 %v1547
    %v1628 = vpop.f32.mrb[0].mxu0
    %v1629 = vadd.f32 %v307, %v1628
    %v1630 = vpop.f32.mrb[0].mxu0
    %v1631 = vpop.f32.mrb[0].mxu0
    %v1632 = vadd.f32 %v307, %v1631
    %v1633 = vpop.f32.mrb[0].mxu0
    %1634 = vmatprep.mubr.bf16.mxu0 0
    %1635 = vmatmul.mubr.bf16.gmra.mrb[0].mxu0 %v1550
    %v1636 = vpop.f32.mrb[0].mxu0
    %v1637 = vadd.f32 %v307, %v1636
    %v1638 = vpop.f32.mrb[0].mxu0
    %v1639 = vpop.f32.mrb[0].mxu0
    %v1640 = vadd.f32 %v307, %v1639
    %v1641 = vpop.f32.mrb[0].mxu0
    %1642 = vmatprep.mubr.bf16.mxu0 0
    %1643 = vmatmul.mubr.bf16.gmra.mrb[0].mxu0 %v1553
    %v1644 = vpop.f32.mrb[0].mxu0
    %v1645 = vadd.f32 %v307, %v1644
    %v1646 = vpop.f32.mrb[0].mxu0
    %v1647 = vpop.f32.mrb[0].mxu0
    %v1648 = vadd.f32 %v307, %v1647
    %v1649 = vpop.f32.mrb[0].mxu0
    %1650 = vmatprep.mubr.bf16.mxu0 0
    %1651 = vmatmul.mubr.bf16.gmra.mrb[0].mxu0 %v1556
    %v1652 = vpop.f32.mrb[0].mxu0
    %v1653 = vadd.f32 %v307, %v1652
    %v1654 = vpop.f32.mrb[0].mxu0
    %v1655 = vpop.f32.mrb[0].mxu0
    %v1656 = vadd.f32 %v307, %v1655
    %v1657 = vpop.f32.mrb[0].mxu0
    %1658 = vmatprep.mubr.bf16.mxu0 0
    %1659 = vmatmul.mubr.bf16.gmra.mrb[0].mxu0 %v1559
    %v1660 = vpop.f32.mrb[0].mxu0
    %v1661 = vadd.f32 %v307, %v1660
    %v1662 = vpop.f32.mrb[0].mxu0
    %v1663 = vpop.f32.mrb[0].mxu0
    %v1664 = vadd.f32 %v307, %v1663
    %v1665 = vpop.f32.mrb[0].mxu0
    %1666 = vmatprep.mubr.bf16.mxu0 0
    %1667 = vmatmul.mubr.bf16.gmra.mrb[0].mxu0 %v1562
    %v1668 = vpop.f32.mrb[0].mxu0
    %v1669 = vadd.f32 %v307, %v1668
    %v1670 = vpop.f32.mrb[0].mxu0
    %v1671 = vpop.f32.mrb[0].mxu0
    %v1672 = vadd.f32 %v307, %v1671
    %v1673 = vpop.f32.mrb[0].mxu0
    %1674 = vmatprep.mubr.bf16.mxu0 0
    %1675 = vmatmul.mubr.bf16.gmra.mrb[0].mxu0 %v1565
    %v1676 = vpop.f32.mrb[0].mxu0
    %v1677 = vadd.f32 %v307, %v1676
    %v1678 = vpop.f32.mrb[0].mxu0
    %v1679 = vpop.f32.mrb[0].mxu0
    %v1680 = vadd.f32 %v307, %v1679
    %v1681 = vpop.f32.mrb[0].mxu0
    %1682 = vmatprep.mubr.bf16.mxu0 0
    %1683 = vmatmul.mubr.bf16.gmra.mrb[0].mxu0 %v1568
    %v1684 = vpop.f32.mrb[0].mxu0
    %v1685 = vadd.f32 %v307, %v1684
    %v1686 = vpop.f32.mrb[0].mxu0
    %v1687 = vpop.f32.mrb[0].mxu0
    %v1688 = vadd.f32 %v307, %v1687
    %v1689 = vpop.f32.mrb[0].mxu0
    %1690 = vmatprep.mubr.bf16.mxu0 0
    %1691 = vmatmul.mubr.bf16.gmra.mrb[0].mxu0 %v1571
    %v1692 = vpop.f32.mrb[0].mxu0
    %v1693 = vadd.f32 %v307, %v1692
    %v1694 = vpop.f32.mrb[0].mxu0
    %v1695 = vpop.f32.mrb[0].mxu0
    %v1696 = vadd.f32 %v307, %v1695
    %v1697 = vpop.f32.mrb[0].mxu0
    %1698 = vmatprep.mubr.bf16.mxu0 0
    %1699 = vmatmul.mubr.bf16.gmra.mrb[0].mxu0 %v1574
    %v1700 = vpop.f32.mrb[0].mxu0
    %v1701 = vadd.f32 %v307, %v1700
    %v1702 = vpop.f32.mrb[0].mxu0
    %v1703 = vpop.f32.mrb[0].mxu0
    %v1704 = vadd.f32 %v307, %v1703
    %v1705 = vpop.f32.mrb[0].mxu0
    %1706 = vmatprep.mubr.bf16.mxu0 0
    %1707 = vmatmul.mubr.bf16.gmra.mrb[0].mxu0 %v1577
    %v1708 = vpop.f32.mrb[0].mxu0
    %v1709 = vadd.f32 %v307, %v1708
    %v1710 = vpop.f32.mrb[0].mxu0
    %v1711 = vpop.f32.mrb[0].mxu0
    %v1712 = vadd.f32 %v307, %v1711
    %v1713 = vpop.f32.mrb[0].mxu0
    %1714 = vmatprep.mubr.bf16.mxu0 0
    %1715 = vmatmul.mubr.bf16.gmra.mrb[0].mxu0 %v1580
    %v1716 = vpop.f32.mrb[0].mxu0
    %v1717 = vadd.f32 %v307, %v1716
    %v1718 = vpop.f32.mrb[0].mxu0
    %v1719 = vpop.f32.mrb[0].mxu0
    %v1720 = vadd.f32 %v307, %v1719
    %v1721 = vpop.f32.mrb[0].mxu0
    %1722 = vmatprep.mubr.bf16.mxu0 0
    %1723 = vmatmul.mubr.bf16.gmra.mrb[0].mxu0 %v1583
    %v1724 = vpop.f32.mrb[0].mxu0
    %v1725 = vadd.f32 %v307, %v1724
    %v1726 = vpop.f32.mrb[0].mxu0
    %v1727 = vpop.f32.mrb[0].mxu0
    %v1728 = vadd.f32 %v307, %v1727
    %v1729 = vpop.f32.mrb[0].mxu0
    %1730 = vmatprep.mubr.bf16.mxu0 0
    %1731 = vmatmul.mubr.bf16.gmra.mrb[0].mxu0 %v1586
    %v1732 = vpop.f32.mrb[0].mxu0
    %v1733 = vadd.f32 %v307, %v1732
    %v1734 = vpop.f32.mrb[0].mxu0
    %v1735 = vpop.f32.mrb[0].mxu0
    %v1736 = vadd.f32 %v307, %v1735
    %v1737 = vpop.f32.mrb[0].mxu0
    %1738 = vmatprep.mubr.bf16.mxu0 0
    %1739 = vmatmul.mubr.bf16.gmra.mrb[0].mxu0 %v1589
    %v1740 = vpop.f32.mrb[0].mxu0
    %v1741 = vadd.f32 %v307, %v1740
    %v1742 = vpop.f32.mrb[0].mxu0
    %v1743 = vpop.f32.mrb[0].mxu0
    %v1744 = vadd.f32 %v307, %v1743
    %v1745 = vpop.f32.mrb[0].mxu0
    %1746 = vmatprep.mubr.bf16.mxu0 0
    %1747 = vmatmul.mubr.bf16.gmra.mrb[0].mxu0 %v1592
    %v1748 = vpop.f32.mrb[0].mxu0
    %v1749 = vadd.f32 %v307, %v1748
    %v1750 = vpop.f32.mrb[0].mxu0
    %v1751 = vpop.f32.mrb[0].mxu0
    %v1752 = vadd.f32 %v307, %v1751
    %v1753 = vpop.f32.mrb[0].mxu0
    %1754 = vdwg.mxu0
    %v1755 = vlaneseq
    %v1756 = vshrl.u32 %v1755, 7
    %v1757 = vsub.s32 1, %v1756
    %v1758 = vrot.slane %v271, %v1757
    %v1759 = vmul.f32 %v1629, %v1758
    %v1760 = vmul.f32 %v1632, %v1758
    %v1761 = vmul.f32 %v1637, %v1758
    %v1762 = vmul.f32 %v1640, %v1758
    %v1763 = vmul.f32 %v1645, %v1758
    %v1764 = vmul.f32 %v1648, %v1758
    %v1765 = vmul.f32 %v1653, %v1758
    %v1766 = vmul.f32 %v1656, %v1758
    %v1767 = vmul.f32 %v1661, %v1758
    %v1768 = vmul.f32 %v1664, %v1758
    %v1769 = vmul.f32 %v1669, %v1758
    %v1770 = vmul.f32 %v1672, %v1758
    %v1771 = vmul.f32 %v1677, %v1758
    %v1772 = vmul.f32 %v1680, %v1758
    %v1773 = vmul.f32 %v1685, %v1758
    %v1774 = vmul.f32 %v1688, %v1758
    %v1775 = vmul.f32 %v1693, %v1758
    %v1776 = vmul.f32 %v1696, %v1758
    %v1777 = vmul.f32 %v1701, %v1758
    %v1778 = vmul.f32 %v1704, %v1758
    %v1779 = vmul.f32 %v1709, %v1758
    %v1780 = vmul.f32 %v1712, %v1758
    %v1781 = vmul.f32 %v1717, %v1758
    %v1782 = vmul.f32 %v1720, %v1758
    %v1783 = vmul.f32 %v1725, %v1758
    %v1784 = vmul.f32 %v1728, %v1758
    %v1785 = vmul.f32 %v1733, %v1758
    %v1786 = vmul.f32 %v1736, %v1758
    %v1787 = vmul.f32 %v1741, %v1758
    %v1788 = vmul.f32 %v1744, %v1758
    %v1789 = vmul.f32 %v1749, %v1758
    %v1790 = vmul.f32 %v1752, %v1758
    %v1791 = vlaneseq
    %v1792 = vshrl.u32 %v1791, 7
    %v1793 = vsub.s32 1, %v1792
    %v1794 = vrot.slane %v181, %v1793
    %v1795 = vadd.f32 %v1759, %v1794
    %v1796 = vadd.f32 %v1760, %v1794
    %v1797 = vadd.f32 %v1761, %v1794
    %v1798 = vadd.f32 %v1762, %v1794
    %v1799 = vadd.f32 %v1763, %v1794
    %v1800 = vadd.f32 %v1764, %v1794
    %v1801 = vadd.f32 %v1765, %v1794
    %v1802 = vadd.f32 %v1766, %v1794
    %v1803 = vadd.f32 %v1767, %v1794
    %v1804 = vadd.f32 %v1768, %v1794
    %v1805 = vadd.f32 %v1769, %v1794
    %v1806 = vadd.f32 %v1770, %v1794
    %v1807 = vadd.f32 %v1771, %v1794
    %v1808 = vadd.f32 %v1772, %v1794
    %v1809 = vadd.f32 %v1773, %v1794
    %v1810 = vadd.f32 %v1774, %v1794
    %v1811 = vadd.f32 %v1775, %v1794
    %v1812 = vadd.f32 %v1776, %v1794
    %v1813 = vadd.f32 %v1777, %v1794
    %v1814 = vadd.f32 %v1778, %v1794
    %v1815 = vadd.f32 %v1779, %v1794
    %v1816 = vadd.f32 %v1780, %v1794
    %v1817 = vadd.f32 %v1781, %v1794
    %v1818 = vadd.f32 %v1782, %v1794
    %v1819 = vadd.f32 %v1783, %v1794
    %v1820 = vadd.f32 %v1784, %v1794
    %v1821 = vadd.f32 %v1785, %v1794
    %v1822 = vadd.f32 %v1786, %v1794
    %v1823 = vadd.f32 %v1787, %v1794
    %v1824 = vadd.f32 %v1788, %v1794
    %v1825 = vadd.f32 %v1789, %v1794
    %v1826 = vadd.f32 %v1790, %v1794
    %v1827 = vmax.f32 %v1795, 0.0
    %v1828 = vmax.f32 %v1796, 0.0
    %v1829 = vmax.f32 %v1797, 0.0
    %v1830 = vmax.f32 %v1798, 0.0
    %v1831 = vmax.f32 %v1799, 0.0
    %v1832 = vmax.f32 %v1800, 0.0
    %v1833 = vmax.f32 %v1801, 0.0
    %v1834 = vmax.f32 %v1802, 0.0
    %v1835 = vmax.f32 %v1803, 0.0
    %v1836 = vmax.f32 %v1804, 0.0
    %v1837 = vmax.f32 %v1805, 0.0
    %v1838 = vmax.f32 %v1806, 0.0
    %v1839 = vmax.f32 %v1807, 0.0
    %v1840 = vmax.f32 %v1808, 0.0
    %v1841 = vmax.f32 %v1809, 0.0
    %v1842 = vmax.f32 %v1810, 0.0
    %v1843 = vmax.f32 %v1811, 0.0
    %v1844 = vmax.f32 %v1812, 0.0
    %v1845 = vmax.f32 %v1813, 0.0
    %v1846 = vmax.f32 %v1814, 0.0
    %v1847 = vmax.f32 %v1815, 0.0
    %v1848 = vmax.f32 %v1816, 0.0
    %v1849 = vmax.f32 %v1817, 0.0
    %v1850 = vmax.f32 %v1818, 0.0
    %v1851 = vmax.f32 %v1819, 0.0
    %v1852 = vmax.f32 %v1820, 0.0
    %v1853 = vmax.f32 %v1821, 0.0
    %v1854 = vmax.f32 %v1822, 0.0
    %v1855 = vmax.f32 %v1823, 0.0
    %v1856 = vmax.f32 %v1824, 0.0
    %v1857 = vmax.f32 %v1825, 0.0
    %v1858 = vmax.f32 %v1826, 0.0
    %1859 = vmatprep.subr.mxu0 0.0
    %1860 = vmatpush1.msra.mxu0 %v1827
    %1861 = vmatprep.subr.mxu0 0.0
    %1862 = vmatpush1.msra.mxu0 %v1828
    %1863 = vmatprep.subr.mxu0 0.0
    %1864 = vmatpush1.msra.mxu0 %v1829
    %1865 = vmatprep.subr.mxu0 0.0
    %1866 = vmatpush1.msra.mxu0 %v1830
    %1867 = vmatprep.subr.mxu0 0.0
    %1868 = vmatpush1.msra.mxu0 %v1831
    %1869 = vmatprep.subr.mxu0 0.0
    %1870 = vmatpush1.msra.mxu0 %v1832
    %1871 = vmatprep.subr.mxu0 0.0
    %1872 = vmatpush1.msra.mxu0 %v1833
    %1873 = vmatprep.subr.mxu0 0.0
    %1874 = vmatpush1.msra.mxu0 %v1834
    %1875 = vmatprep.subr.mxu0 0.0
    %1876 = vmatpush1.msra.mxu0 %v1835
    %1877 = vmatprep.subr.mxu0 0.0
    %1878 = vmatpush1.msra.mxu0 %v1836
    %1879 = vmatprep.subr.mxu0 0.0
    %1880 = vmatpush1.msra.mxu0 %v1837
    %1881 = vmatprep.subr.mxu0 0.0
    %1882 = vmatpush1.msra.mxu0 %v1838
    %1883 = vmatprep.subr.mxu0 0.0
    %1884 = vmatpush1.msra.mxu0 %v1839
    %1885 = vmatprep.subr.mxu0 0.0
    %1886 = vmatpush1.msra.mxu0 %v1840
    %1887 = vmatprep.subr.mxu0 0.0
    %1888 = vmatpush1.msra.mxu0 %v1841
    %1889 = vmatprep.subr.mxu0 0.0
    %1890 = vmatpush1.msra.mxu0 %v1842
    %1891 = vmatprep.subr.mxu0 0.0
    %1892 = vmatpush1.msra.mxu0 %v1843
    %1893 = vmatprep.subr.mxu0 0.0
    %1894 = vmatpush1.msra.mxu0 %v1844
    %1895 = vmatprep.subr.mxu0 0.0
    %1896 = vmatpush1.msra.mxu0 %v1845
    %1897 = vmatprep.subr.mxu0 0.0
    %1898 = vmatpush1.msra.mxu0 %v1846
    %1899 = vmatprep.subr.mxu0 0.0
    %1900 = vmatpush1.msra.mxu0 %v1847
    %1901 = vmatprep.subr.mxu0 0.0
    %1902 = vmatpush1.msra.mxu0 %v1848
    %1903 = vmatprep.subr.mxu0 0.0
    %1904 = vmatpush1.msra.mxu0 %v1849
    %1905 = vmatprep.subr.mxu0 0.0
    %1906 = vmatpush1.msra.mxu0 %v1850
    %1907 = vmatprep.subr.mxu0 0.0
    %1908 = vmatpush1.msra.mxu0 %v1851
    %1909 = vmatprep.subr.mxu0 0.0
    %1910 = vmatpush1.msra.mxu0 %v1852
    %1911 = vmatprep.subr.mxu0 0.0
    %1912 = vmatpush1.msra.mxu0 %v1853
    %1913 = vmatprep.subr.mxu0 0.0
    %1914 = vmatpush1.msra.mxu0 %v1854
    %1915 = vmatprep.subr.mxu0 0.0
    %1916 = vmatpush1.msra.mxu0 %v1855
    %1917 = vmatprep.subr.mxu0 0.0
    %1918 = vmatpush1.msra.mxu0 %v1856
    %1919 = vmatprep.subr.mxu0 0.0
    %1920 = vmatpush1.msra.mxu0 %v1857
    %1921 = vmatprep.subr.mxu0 0.0
    %1922 = vmatpush1.msra.mxu0 %v1858
    %1923 = vmatprep.mubr.f32.mxu0 0.00390625
    %1924 = vmatmul.mubr.f32.gmra.mrb[0].mxu0 0.00390625
    %v1925 = vpop.f32.mrb[0].mxu0
    %v1926 = vadd.f32 0.0, %v1925
    %v1927 = vpop.f32.mrb[0].mxu0
    %1928 = vdwg.mxu0
    %v1930 = vsel %vm31, %v1926, 0
    %1932 = vmatprep.subr.mxu0 0.0
    %1933 = vmatpush1.msra.mxu0 %v790
    %1934 = vmatprep.subr.mxu0 0.0
    %1935 = vmatpush1.msra.mxu0 %v791
    %1936 = vmatprep.subr.mxu0 0.0
    %1937 = vmatpush1.msra.mxu0 %v792
    %1938 = vmatprep.subr.mxu0 0.0
    %1939 = vmatpush1.msra.mxu0 %v793
    %1940 = vmatprep.subr.mxu0 0.0
    %1941 = vmatpush1.msra.mxu0 0.0
    %1942 = vmatprep.subr.mxu0 0.0
    %1943 = vmatpush1.msra.mxu0 0.0
    %1944 = vmatprep.subr.mxu0 0.0
    %1945 = vmatpush1.msra.mxu0 0.0
    %1946 = vmatprep.subr.mxu0 0.0
    %1947 = vmatpush1.msra.mxu0 0.0
    %1948 = vmatprep.subr.mxu0 0.0
    %1949 = vmatpush1.msra.mxu0 0.0
    %1950 = vmatprep.subr.mxu0 0.0
    %1951 = vmatpush1.msra.mxu0 0.0
    %1952 = vmatprep.subr.mxu0 0.0
    %1953 = vmatpush1.msra.mxu0 0.0
    %1954 = vmatprep.subr.mxu0 0.0
    %1955 = vmatpush1.msra.mxu0 0.0
    %1956 = vmatprep.subr.mxu0 0.0
    %1957 = vmatpush1.msra.mxu0 0.0
    %1958 = vmatprep.subr.mxu0 0.0
    %1959 = vmatpush1.msra.mxu0 0.0
    %1960 = vmatprep.subr.mxu0 0.0
    %1961 = vmatpush1.msra.mxu0 0.0
    %1962 = vmatprep.subr.mxu0 0.0
    %1963 = vmatpush1.msra.mxu0 0.0
    %1964 = vmatprep.subr.mxu0 0.0
    %1965 = vmatpush1.msra.mxu0 0.0
    %1966 = vmatprep.subr.mxu0 0.0
    %1967 = vmatpush1.msra.mxu0 0.0
    %1968 = vmatprep.subr.mxu0 0.0
    %1969 = vmatpush1.msra.mxu0 0.0
    %1970 = vmatprep.subr.mxu0 0.0
    %1971 = vmatpush1.msra.mxu0 0.0
    %1972 = vmatprep.subr.mxu0 0.0
    %1973 = vmatpush1.msra.mxu0 0.0
    %1974 = vmatprep.subr.mxu0 0.0
    %1975 = vmatpush1.msra.mxu0 0.0
    %1976 = vmatprep.subr.mxu0 0.0
    %1977 = vmatpush1.msra.mxu0 0.0
    %1978 = vmatprep.subr.mxu0 0.0
    %1979 = vmatpush1.msra.mxu0 0.0
    %1980 = vmatprep.subr.mxu0 0.0
    %1981 = vmatpush1.msra.mxu0 0.0
    %1982 = vmatprep.subr.mxu0 0.0
    %1983 = vmatpush1.msra.mxu0 0.0
    %1984 = vmatprep.subr.mxu0 0.0
    %1985 = vmatpush1.msra.mxu0 0.0
    %1986 = vmatprep.subr.mxu0 0.0
    %1987 = vmatpush1.msra.mxu0 0.0
    %1988 = vmatprep.subr.mxu0 0.0
    %1989 = vmatpush1.msra.mxu0 0.0
    %1990 = vmatprep.subr.mxu0 0.0
    %1991 = vmatpush1.msra.mxu0 0.0
    %1992 = vmatprep.subr.mxu0 0.0
    %1993 = vmatpush1.msra.mxu0 0.0
    %1994 = vmatprep.subr.mxu0 0.0
    %1995 = vmatpush1.msra.mxu0 0.0
    %1996 = vmatprep.mubr.f32.mxu0 0.0
    %1997 = vmatmul.mubr.f32.gmra.mrb[0].mxu0 %v1930
    %v1998 = vpop.f32.mrb[0].mxu0
    %v1999 = vadd.f32 0.0, %v1998
    %v2000 = vpop.f32.mrb[0].mxu0
    %2001 = vdwg.mxu0
    %v2003 = vrot.slane %v1999, 7
    %v2005 = vadd.f32 %v268, %v2003
    %v2006 = vld [vmem:[%s1 + $0x180] sm:$0xf]
    %v2007 = vld [vmem:[%s1 + $0x184] sm:$0xf]
    %v2008 = vld [vmem:[%s1 + $0x188] sm:$0xf]
    %v2009 = vld [vmem:[%s1 + $0x18c] sm:$0xf]
    %v2010 = vld [vmem:[%s1 + $0x190] sm:$0xf]
    %v2011 = vld [vmem:[%s1 + $0x194] sm:$0xf]
    %v2012 = vld [vmem:[%s1 + $0x198] sm:$0xf]
    %v2013 = vld [vmem:[%s1 + $0x19c] sm:$0xf]
    %v2014 = vld [vmem:[%s1 + $0x1a0] sm:$0xf]
    %v2015 = vld [vmem:[%s1 + $0x1a4] sm:$0xf]
    %v2016 = vld [vmem:[%s1 + $0x1a8] sm:$0xf]
    %v2017 = vld [vmem:[%s1 + $0x1ac] sm:$0xf]
    %v2018 = vld [vmem:[%s1 + $0x1b0] sm:$0xf]
    %v2019 = vld [vmem:[%s1 + $0x1b4] sm:$0xf]
    %v2020 = vld [vmem:[%s1 + $0x1b8] sm:$0xf]
    %v2021 = vld [vmem:[%s1 + $0x1bc] sm:$0xf]
    %v2022 = vld [vmem:[%s1 + $0x1c0] sm:$0xf]
    %v2023 = vld [vmem:[%s1 + $0x1c4] sm:$0xf]
    %v2024 = vld [vmem:[%s1 + $0x1c8] sm:$0xf]
    %v2025 = vld [vmem:[%s1 + $0x1cc] sm:$0xf]
    %v2026 = vld [vmem:[%s1 + $0x1d0] sm:$0xf]
    %v2027 = vld [vmem:[%s1 + $0x1d4] sm:$0xf]
    %v2028 = vld [vmem:[%s1 + $0x1d8] sm:$0xf]
    %v2029 = vld [vmem:[%s1 + $0x1dc] sm:$0xf]
    %v2030 = vld [vmem:[%s1 + $0x1e0] sm:$0xf]
    %v2031 = vld [vmem:[%s1 + $0x1e4] sm:$0xf]
    %v2032 = vld [vmem:[%s1 + $0x1e8] sm:$0xf]
    %v2033 = vld [vmem:[%s1 + $0x1ec] sm:$0xf]
    %v2034 = vld [vmem:[%s1 + $0x1f0] sm:$0xf]
    %v2035 = vld [vmem:[%s1 + $0x1f4] sm:$0xf]
    %v2036 = vld [vmem:[%s1 + $0x1f8] sm:$0xf]
    %v2037 = vld [vmem:[%s1 + $0x1fc] sm:$0xf]
    %v2070 = vunpack.c.l.b16 %v2006
    %v2071 = vunpack.c.l.b16 %v2007
    %v2072 = vunpack.c.l.b16 %v2008
    %v2073 = vunpack.c.l.b16 %v2009
    %v2074 = vunpack.c.l.b16 %v2010
    %v2075 = vunpack.c.l.b16 %v2011
    %v2076 = vunpack.c.l.b16 %v2012
    %v2077 = vunpack.c.l.b16 %v2013
    %v2078 = vunpack.c.l.b16 %v2014
    %v2079 = vunpack.c.l.b16 %v2015
    %v2080 = vunpack.c.l.b16 %v2016
    %v2081 = vunpack.c.l.b16 %v2017
    %v2082 = vunpack.c.l.b16 %v2018
    %v2083 = vunpack.c.l.b16 %v2019
    %v2084 = vunpack.c.l.b16 %v2020
    %v2085 = vunpack.c.l.b16 %v2021
    %v2086 = vunpack.c.l.b16 %v2022
    %v2087 = vunpack.c.l.b16 %v2023
    %v2088 = vunpack.c.l.b16 %v2024
    %v2089 = vunpack.c.l.b16 %v2025
    %v2090 = vunpack.c.l.b16 %v2026
    %v2091 = vunpack.c.l.b16 %v2027
    %v2092 = vunpack.c.l.b16 %v2028
    %v2093 = vunpack.c.l.b16 %v2029
    %v2094 = vunpack.c.l.b16 %v2030
    %v2095 = vunpack.c.l.b16 %v2031
    %v2096 = vunpack.c.l.b16 %v2032
    %v2097 = vunpack.c.l.b16 %v2033
    %v2098 = vunpack.c.l.b16 %v2034
    %v2099 = vunpack.c.l.b16 %v2035
    %v2100 = vunpack.c.l.b16 %v2036
    %v2101 = vunpack.c.l.b16 %v2037
    %v2102 = vpack.c.b16 %v2071, %v2070
    %v2103 = vpack.c.b16 %v2073, %v2072
    %v2104 = vpack.c.b16 %v2075, %v2074
    %v2105 = vpack.c.b16 %v2077, %v2076
    %v2106 = vpack.c.b16 %v2079, %v2078
    %v2107 = vpack.c.b16 %v2081, %v2080
    %v2108 = vpack.c.b16 %v2083, %v2082
    %v2109 = vpack.c.b16 %v2085, %v2084
    %v2110 = vpack.c.b16 %v2087, %v2086
    %v2111 = vpack.c.b16 %v2089, %v2088
    %v2112 = vpack.c.b16 %v2091, %v2090
    %v2113 = vpack.c.b16 %v2093, %v2092
    %v2114 = vpack.c.b16 %v2095, %v2094
    %v2115 = vpack.c.b16 %v2097, %v2096
    %v2116 = vpack.c.b16 %v2099, %v2098
    %v2117 = vpack.c.b16 %v2101, %v2100
    %v2119 = vsel %vm399, %v2102, 0
    %v2122 = vsel %vm399, %v2103, 0
    %v2125 = vsel %vm399, %v2104, 0
    %v2128 = vsel %vm399, %v2105, 0
    %v2131 = vsel %vm399, %v2106, 0
    %v2134 = vsel %vm399, %v2107, 0
    %v2137 = vsel %vm399, %v2108, 0
    %v2140 = vsel %vm399, %v2109, 0
    %v2143 = vsel %vm399, %v2110, 0
    %v2146 = vsel %vm399, %v2111, 0
    %v2149 = vsel %vm399, %v2112, 0
    %v2152 = vsel %vm399, %v2113, 0
    %v2155 = vsel %vm399, %v2114, 0
    %v2158 = vsel %vm399, %v2115, 0
    %v2161 = vsel %vm399, %v2116, 0
    %v2164 = vsel %vm399, %v2117, 0
    %2166 = vmatprep.subr.bf16.mxu0 0
    %2167 = vmatpush1.bf16.msra.mxu0 %v396
    %2168 = vmatprep.subr.bf16.mxu0 0
    %2169 = vmatpush1.bf16.msra.mxu0 %v453
    %2170 = vmatprep.subr.bf16.mxu0 0
    %2171 = vmatpush1.bf16.msra.mxu0 0
    %2172 = vmatprep.subr.bf16.mxu0 0
    %2173 = vmatpush1.bf16.msra.mxu0 0
    %2174 = vmatprep.subr.bf16.mxu0 0
    %2175 = vmatpush1.bf16.msra.mxu0 0
    %2176 = vmatprep.subr.bf16.mxu0 0
    %2177 = vmatpush1.bf16.msra.mxu0 0
    %2178 = vmatprep.subr.bf16.mxu0 0
    %2179 = vmatpush1.bf16.msra.mxu0 0
    %2180 = vmatprep.subr.bf16.mxu0 0
    %2181 = vmatpush1.bf16.msra.mxu0 0
    %2182 = vmatprep.subr.bf16.mxu0 0
    %2183 = vmatpush1.bf16.msra.mxu0 0
    %2184 = vmatprep.subr.bf16.mxu0 0
    %2185 = vmatpush1.bf16.msra.mxu0 0
    %2186 = vmatprep.subr.bf16.mxu0 0
    %2187 = vmatpush1.bf16.msra.mxu0 0
    %2188 = vmatprep.subr.bf16.mxu0 0
    %2189 = vmatpush1.bf16.msra.mxu0 0
    %2190 = vmatprep.subr.bf16.mxu0 0
    %2191 = vmatpush1.bf16.msra.mxu0 0
    %2192 = vmatprep.subr.bf16.mxu0 0
    %2193 = vmatpush1.bf16.msra.mxu0 0
    %2194 = vmatprep.subr.bf16.mxu0 0
    %2195 = vmatpush1.bf16.msra.mxu0 0
    %2196 = vmatprep.subr.bf16.mxu0 0
    %2197 = vmatpush1.bf16.msra.mxu0 0
    %2198 = vmatprep.mubr.bf16.mxu0 0
    %2199 = vmatmul.mubr.bf16.gmra.mrb[0].mxu0 %v2119
    %v2200 = vpop.f32.mrb[0].mxu0
    %v2201 = vadd.f32 %v307, %v2200
    %v2202 = vpop.f32.mrb[0].mxu0
    %v2203 = vpop.f32.mrb[0].mxu0
    %v2204 = vadd.f32 %v307, %v2203
    %v2205 = vpop.f32.mrb[0].mxu0
    %2206 = vmatprep.mubr.bf16.mxu0 0
    %2207 = vmatmul.mubr.bf16.gmra.mrb[0].mxu0 %v2122
    %v2208 = vpop.f32.mrb[0].mxu0
    %v2209 = vadd.f32 %v307, %v2208
    %v2210 = vpop.f32.mrb[0].mxu0
    %v2211 = vpop.f32.mrb[0].mxu0
    %v2212 = vadd.f32 %v307, %v2211
    %v2213 = vpop.f32.mrb[0].mxu0
    %2214 = vmatprep.mubr.bf16.mxu0 0
    %2215 = vmatmul.mubr.bf16.gmra.mrb[0].mxu0 %v2125
    %v2216 = vpop.f32.mrb[0].mxu0
    %v2217 = vadd.f32 %v307, %v2216
    %v2218 = vpop.f32.mrb[0].mxu0
    %v2219 = vpop.f32.mrb[0].mxu0
    %v2220 = vadd.f32 %v307, %v2219
    %v2221 = vpop.f32.mrb[0].mxu0
    %2222 = vmatprep.mubr.bf16.mxu0 0
    %2223 = vmatmul.mubr.bf16.gmra.mrb[0].mxu0 %v2128
    %v2224 = vpop.f32.mrb[0].mxu0
    %v2225 = vadd.f32 %v307, %v2224
    %v2226 = vpop.f32.mrb[0].mxu0
    %v2227 = vpop.f32.mrb[0].mxu0
    %v2228 = vadd.f32 %v307, %v2227
    %v2229 = vpop.f32.mrb[0].mxu0
    %2230 = vmatprep.mubr.bf16.mxu0 0
    %2231 = vmatmul.mubr.bf16.gmra.mrb[0].mxu0 %v2131
    %v2232 = vpop.f32.mrb[0].mxu0
    %v2233 = vadd.f32 %v307, %v2232
    %v2234 = vpop.f32.mrb[0].mxu0
    %v2235 = vpop.f32.mrb[0].mxu0
    %v2236 = vadd.f32 %v307, %v2235
    %v2237 = vpop.f32.mrb[0].mxu0
    %2238 = vmatprep.mubr.bf16.mxu0 0
    %2239 = vmatmul.mubr.bf16.gmra.mrb[0].mxu0 %v2134
    %v2240 = vpop.f32.mrb[0].mxu0
    %v2241 = vadd.f32 %v307, %v2240
    %v2242 = vpop.f32.mrb[0].mxu0
    %v2243 = vpop.f32.mrb[0].mxu0
    %v2244 = vadd.f32 %v307, %v2243
    %v2245 = vpop.f32.mrb[0].mxu0
    %2246 = vmatprep.mubr.bf16.mxu0 0
    %2247 = vmatmul.mubr.bf16.gmra.mrb[0].mxu0 %v2137
    %v2248 = vpop.f32.mrb[0].mxu0
    %v2249 = vadd.f32 %v307, %v2248
    %v2250 = vpop.f32.mrb[0].mxu0
    %v2251 = vpop.f32.mrb[0].mxu0
    %v2252 = vadd.f32 %v307, %v2251
    %v2253 = vpop.f32.mrb[0].mxu0
    %2254 = vmatprep.mubr.bf16.mxu0 0
    %2255 = vmatmul.mubr.bf16.gmra.mrb[0].mxu0 %v2140
    %v2256 = vpop.f32.mrb[0].mxu0
    %v2257 = vadd.f32 %v307, %v2256
    %v2258 = vpop.f32.mrb[0].mxu0
    %v2259 = vpop.f32.mrb[0].mxu0
    %v2260 = vadd.f32 %v307, %v2259
    %v2261 = vpop.f32.mrb[0].mxu0
    %2262 = vmatprep.mubr.bf16.mxu0 0
    %2263 = vmatmul.mubr.bf16.gmra.mrb[0].mxu0 %v2143
    %v2264 = vpop.f32.mrb[0].mxu0
    %v2265 = vadd.f32 %v307, %v2264
    %v2266 = vpop.f32.mrb[0].mxu0
    %v2267 = vpop.f32.mrb[0].mxu0
    %v2268 = vadd.f32 %v307, %v2267
    %v2269 = vpop.f32.mrb[0].mxu0
    %2270 = vmatprep.mubr.bf16.mxu0 0
    %2271 = vmatmul.mubr.bf16.gmra.mrb[0].mxu0 %v2146
    %v2272 = vpop.f32.mrb[0].mxu0
    %v2273 = vadd.f32 %v307, %v2272
    %v2274 = vpop.f32.mrb[0].mxu0
    %v2275 = vpop.f32.mrb[0].mxu0
    %v2276 = vadd.f32 %v307, %v2275
    %v2277 = vpop.f32.mrb[0].mxu0
    %2278 = vmatprep.mubr.bf16.mxu0 0
    %2279 = vmatmul.mubr.bf16.gmra.mrb[0].mxu0 %v2149
    %v2280 = vpop.f32.mrb[0].mxu0
    %v2281 = vadd.f32 %v307, %v2280
    %v2282 = vpop.f32.mrb[0].mxu0
    %v2283 = vpop.f32.mrb[0].mxu0
    %v2284 = vadd.f32 %v307, %v2283
    %v2285 = vpop.f32.mrb[0].mxu0
    %2286 = vmatprep.mubr.bf16.mxu0 0
    %2287 = vmatmul.mubr.bf16.gmra.mrb[0].mxu0 %v2152
    %v2288 = vpop.f32.mrb[0].mxu0
    %v2289 = vadd.f32 %v307, %v2288
    %v2290 = vpop.f32.mrb[0].mxu0
    %v2291 = vpop.f32.mrb[0].mxu0
    %v2292 = vadd.f32 %v307, %v2291
    %v2293 = vpop.f32.mrb[0].mxu0
    %2294 = vmatprep.mubr.bf16.mxu0 0
    %2295 = vmatmul.mubr.bf16.gmra.mrb[0].mxu0 %v2155
    %v2296 = vpop.f32.mrb[0].mxu0
    %v2297 = vadd.f32 %v307, %v2296
    %v2298 = vpop.f32.mrb[0].mxu0
    %v2299 = vpop.f32.mrb[0].mxu0
    %v2300 = vadd.f32 %v307, %v2299
    %v2301 = vpop.f32.mrb[0].mxu0
    %2302 = vmatprep.mubr.bf16.mxu0 0
    %2303 = vmatmul.mubr.bf16.gmra.mrb[0].mxu0 %v2158
    %v2304 = vpop.f32.mrb[0].mxu0
    %v2305 = vadd.f32 %v307, %v2304
    %v2306 = vpop.f32.mrb[0].mxu0
    %v2307 = vpop.f32.mrb[0].mxu0
    %v2308 = vadd.f32 %v307, %v2307
    %v2309 = vpop.f32.mrb[0].mxu0
    %2310 = vmatprep.mubr.bf16.mxu0 0
    %2311 = vmatmul.mubr.bf16.gmra.mrb[0].mxu0 %v2161
    %v2312 = vpop.f32.mrb[0].mxu0
    %v2313 = vadd.f32 %v307, %v2312
    %v2314 = vpop.f32.mrb[0].mxu0
    %v2315 = vpop.f32.mrb[0].mxu0
    %v2316 = vadd.f32 %v307, %v2315
    %v2317 = vpop.f32.mrb[0].mxu0
    %2318 = vmatprep.mubr.bf16.mxu0 0
    %2319 = vmatmul.mubr.bf16.gmra.mrb[0].mxu0 %v2164
    %v2320 = vpop.f32.mrb[0].mxu0
    %v2321 = vadd.f32 %v307, %v2320
    %v2322 = vpop.f32.mrb[0].mxu0
    %v2323 = vpop.f32.mrb[0].mxu0
    %v2324 = vadd.f32 %v307, %v2323
    %v2325 = vpop.f32.mrb[0].mxu0
    %2326 = vdwg.mxu0
    %v2327 = vmul.f32 %v2201, %v1758
    %v2328 = vmul.f32 %v2204, %v1758
    %v2329 = vmul.f32 %v2209, %v1758
    %v2330 = vmul.f32 %v2212, %v1758
    %v2331 = vmul.f32 %v2217, %v1758
    %v2332 = vmul.f32 %v2220, %v1758
    %v2333 = vmul.f32 %v2225, %v1758
    %v2334 = vmul.f32 %v2228, %v1758
    %v2335 = vmul.f32 %v2233, %v1758
    %v2336 = vmul.f32 %v2236, %v1758
    %v2337 = vmul.f32 %v2241, %v1758
    %v2338 = vmul.f32 %v2244, %v1758
    %v2339 = vmul.f32 %v2249, %v1758
    %v2340 = vmul.f32 %v2252, %v1758
    %v2341 = vmul.f32 %v2257, %v1758
    %v2342 = vmul.f32 %v2260, %v1758
    %v2343 = vmul.f32 %v2265, %v1758
    %v2344 = vmul.f32 %v2268, %v1758
    %v2345 = vmul.f32 %v2273, %v1758
    %v2346 = vmul.f32 %v2276, %v1758
    %v2347 = vmul.f32 %v2281, %v1758
    %v2348 = vmul.f32 %v2284, %v1758
    %v2349 = vmul.f32 %v2289, %v1758
    %v2350 = vmul.f32 %v2292, %v1758
    %v2351 = vmul.f32 %v2297, %v1758
    %v2352 = vmul.f32 %v2300, %v1758
    %v2353 = vmul.f32 %v2305, %v1758
    %v2354 = vmul.f32 %v2308, %v1758
    %v2355 = vmul.f32 %v2313, %v1758
    %v2356 = vmul.f32 %v2316, %v1758
    %v2357 = vmul.f32 %v2321, %v1758
    %v2358 = vmul.f32 %v2324, %v1758
    %v2359 = vadd.f32 %v2327, %v1794
    %v2360 = vadd.f32 %v2328, %v1794
    %v2361 = vadd.f32 %v2329, %v1794
    %v2362 = vadd.f32 %v2330, %v1794
    %v2363 = vadd.f32 %v2331, %v1794
    %v2364 = vadd.f32 %v2332, %v1794
    %v2365 = vadd.f32 %v2333, %v1794
    %v2366 = vadd.f32 %v2334, %v1794
    %v2367 = vadd.f32 %v2335, %v1794
    %v2368 = vadd.f32 %v2336, %v1794
    %v2369 = vadd.f32 %v2337, %v1794
    %v2370 = vadd.f32 %v2338, %v1794
    %v2371 = vadd.f32 %v2339, %v1794
    %v2372 = vadd.f32 %v2340, %v1794
    %v2373 = vadd.f32 %v2341, %v1794
    %v2374 = vadd.f32 %v2342, %v1794
    %v2375 = vadd.f32 %v2343, %v1794
    %v2376 = vadd.f32 %v2344, %v1794
    %v2377 = vadd.f32 %v2345, %v1794
    %v2378 = vadd.f32 %v2346, %v1794
    %v2379 = vadd.f32 %v2347, %v1794
    %v2380 = vadd.f32 %v2348, %v1794
    %v2381 = vadd.f32 %v2349, %v1794
    %v2382 = vadd.f32 %v2350, %v1794
    %v2383 = vadd.f32 %v2351, %v1794
    %v2384 = vadd.f32 %v2352, %v1794
    %v2385 = vadd.f32 %v2353, %v1794
    %v2386 = vadd.f32 %v2354, %v1794
    %v2387 = vadd.f32 %v2355, %v1794
    %v2388 = vadd.f32 %v2356, %v1794
    %v2389 = vadd.f32 %v2357, %v1794
    %v2390 = vadd.f32 %v2358, %v1794
    %v2391 = vmax.f32 %v2359, 0.0
    %v2392 = vmax.f32 %v2360, 0.0
    %v2393 = vmax.f32 %v2361, 0.0
    %v2394 = vmax.f32 %v2362, 0.0
    %v2395 = vmax.f32 %v2363, 0.0
    %v2396 = vmax.f32 %v2364, 0.0
    %v2397 = vmax.f32 %v2365, 0.0
    %v2398 = vmax.f32 %v2366, 0.0
    %v2399 = vmax.f32 %v2367, 0.0
    %v2400 = vmax.f32 %v2368, 0.0
    %v2401 = vmax.f32 %v2369, 0.0
    %v2402 = vmax.f32 %v2370, 0.0
    %v2403 = vmax.f32 %v2371, 0.0
    %v2404 = vmax.f32 %v2372, 0.0
    %v2405 = vmax.f32 %v2373, 0.0
    %v2406 = vmax.f32 %v2374, 0.0
    %v2407 = vmax.f32 %v2375, 0.0
    %v2408 = vmax.f32 %v2376, 0.0
    %v2409 = vmax.f32 %v2377, 0.0
    %v2410 = vmax.f32 %v2378, 0.0
    %v2411 = vmax.f32 %v2379, 0.0
    %v2412 = vmax.f32 %v2380, 0.0
    %v2413 = vmax.f32 %v2381, 0.0
    %v2414 = vmax.f32 %v2382, 0.0
    %v2415 = vmax.f32 %v2383, 0.0
    %v2416 = vmax.f32 %v2384, 0.0
    %v2417 = vmax.f32 %v2385, 0.0
    %v2418 = vmax.f32 %v2386, 0.0
    %v2419 = vmax.f32 %v2387, 0.0
    %v2420 = vmax.f32 %v2388, 0.0
    %v2421 = vmax.f32 %v2389, 0.0
    %v2422 = vmax.f32 %v2390, 0.0
    %2423 = vmatprep.subr.mxu0 0.0
    %2424 = vmatpush1.msra.mxu0 %v2391
    %2425 = vmatprep.subr.mxu0 0.0
    %2426 = vmatpush1.msra.mxu0 %v2392
    %2427 = vmatprep.subr.mxu0 0.0
    %2428 = vmatpush1.msra.mxu0 %v2393
    %2429 = vmatprep.subr.mxu0 0.0
    %2430 = vmatpush1.msra.mxu0 %v2394
    %2431 = vmatprep.subr.mxu0 0.0
    %2432 = vmatpush1.msra.mxu0 %v2395
    %2433 = vmatprep.subr.mxu0 0.0
    %2434 = vmatpush1.msra.mxu0 %v2396
    %2435 = vmatprep.subr.mxu0 0.0
    %2436 = vmatpush1.msra.mxu0 %v2397
    %2437 = vmatprep.subr.mxu0 0.0
    %2438 = vmatpush1.msra.mxu0 %v2398
    %2439 = vmatprep.subr.mxu0 0.0
    %2440 = vmatpush1.msra.mxu0 %v2399
    %2441 = vmatprep.subr.mxu0 0.0
    %2442 = vmatpush1.msra.mxu0 %v2400
    %2443 = vmatprep.subr.mxu0 0.0
    %2444 = vmatpush1.msra.mxu0 %v2401
    %2445 = vmatprep.subr.mxu0 0.0
    %2446 = vmatpush1.msra.mxu0 %v2402
    %2447 = vmatprep.subr.mxu0 0.0
    %2448 = vmatpush1.msra.mxu0 %v2403
    %2449 = vmatprep.subr.mxu0 0.0
    %2450 = vmatpush1.msra.mxu0 %v2404
    %2451 = vmatprep.subr.mxu0 0.0
    %2452 = vmatpush1.msra.mxu0 %v2405
    %2453 = vmatprep.subr.mxu0 0.0
    %2454 = vmatpush1.msra.mxu0 %v2406
    %2455 = vmatprep.subr.mxu0 0.0
    %2456 = vmatpush1.msra.mxu0 %v2407
    %2457 = vmatprep.subr.mxu0 0.0
    %2458 = vmatpush1.msra.mxu0 %v2408
    %2459 = vmatprep.subr.mxu0 0.0
    %2460 = vmatpush1.msra.mxu0 %v2409
    %2461 = vmatprep.subr.mxu0 0.0
    %2462 = vmatpush1.msra.mxu0 %v2410
    %2463 = vmatprep.subr.mxu0 0.0
    %2464 = vmatpush1.msra.mxu0 %v2411
    %2465 = vmatprep.subr.mxu0 0.0
    %2466 = vmatpush1.msra.mxu0 %v2412
    %2467 = vmatprep.subr.mxu0 0.0
    %2468 = vmatpush1.msra.mxu0 %v2413
    %2469 = vmatprep.subr.mxu0 0.0
    %2470 = vmatpush1.msra.mxu0 %v2414
    %2471 = vmatprep.subr.mxu0 0.0
    %2472 = vmatpush1.msra.mxu0 %v2415
    %2473 = vmatprep.subr.mxu0 0.0
    %2474 = vmatpush1.msra.mxu0 %v2416
    %2475 = vmatprep.subr.mxu0 0.0
    %2476 = vmatpush1.msra.mxu0 %v2417
    %2477 = vmatprep.subr.mxu0 0.0
    %2478 = vmatpush1.msra.mxu0 %v2418
    %2479 = vmatprep.subr.mxu0 0.0
    %2480 = vmatpush1.msra.mxu0 %v2419
    %2481 = vmatprep.subr.mxu0 0.0
    %2482 = vmatpush1.msra.mxu0 %v2420
    %2483 = vmatprep.subr.mxu0 0.0
    %2484 = vmatpush1.msra.mxu0 %v2421
    %2485 = vmatprep.subr.mxu0 0.0
    %2486 = vmatpush1.msra.mxu0 %v2422
    %2487 = vmatprep.mubr.f32.mxu0 0.00390625
    %2488 = vmatmul.mubr.f32.gmra.mrb[0].mxu0 0.00390625
    %v2489 = vpop.f32.mrb[0].mxu0
    %v2490 = vadd.f32 0.0, %v2489
    %v2491 = vpop.f32.mrb[0].mxu0
    %2492 = vdwg.mxu0
    %v2494 = vsel %vm31, %v2490, 0
    %2496 = vmatprep.subr.mxu0 0.0
    %2497 = vmatpush1.msra.mxu0 %v1355
    %2498 = vmatprep.subr.mxu0 0.0
    %2499 = vmatpush1.msra.mxu0 %v1356
    %2500 = vmatprep.subr.mxu0 0.0
    %2501 = vmatpush1.msra.mxu0 %v1357
    %2502 = vmatprep.subr.mxu0 0.0
    %2503 = vmatpush1.msra.mxu0 %v1358
    %2504 = vmatprep.subr.mxu0 0.0
    %2505 = vmatpush1.msra.mxu0 0.0
    %2506 = vmatprep.subr.mxu0 0.0
    %2507 = vmatpush1.msra.mxu0 0.0
    %2508 = vmatprep.subr.mxu0 0.0
    %2509 = vmatpush1.msra.mxu0 0.0
    %2510 = vmatprep.subr.mxu0 0.0
    %2511 = vmatpush1.msra.mxu0 0.0
    %2512 = vmatprep.subr.mxu0 0.0
    %2513 = vmatpush1.msra.mxu0 0.0
    %2514 = vmatprep.subr.mxu0 0.0
    %2515 = vmatpush1.msra.mxu0 0.0
    %2516 = vmatprep.subr.mxu0 0.0
    %2517 = vmatpush1.msra.mxu0 0.0
    %2518 = vmatprep.subr.mxu0 0.0
    %2519 = vmatpush1.msra.mxu0 0.0
    %2520 = vmatprep.subr.mxu0 0.0
    %2521 = vmatpush1.msra.mxu0 0.0
    %2522 = vmatprep.subr.mxu0 0.0
    %2523 = vmatpush1.msra.mxu0 0.0
    %2524 = vmatprep.subr.mxu0 0.0
    %2525 = vmatpush1.msra.mxu0 0.0
    %2526 = vmatprep.subr.mxu0 0.0
    %2527 = vmatpush1.msra.mxu0 0.0
    %2528 = vmatprep.subr.mxu0 0.0
    %2529 = vmatpush1.msra.mxu0 0.0
    %2530 = vmatprep.subr.mxu0 0.0
    %2531 = vmatpush1.msra.mxu0 0.0
    %2532 = vmatprep.subr.mxu0 0.0
    %2533 = vmatpush1.msra.mxu0 0.0
    %2534 = vmatprep.subr.mxu0 0.0
    %2535 = vmatpush1.msra.mxu0 0.0
    %2536 = vmatprep.subr.mxu0 0.0
    %2537 = vmatpush1.msra.mxu0 0.0
    %2538 = vmatprep.subr.mxu0 0.0
    %2539 = vmatpush1.msra.mxu0 0.0
    %2540 = vmatprep.subr.mxu0 0.0
    %2541 = vmatpush1.msra.mxu0 0.0
    %2542 = vmatprep.subr.mxu0 0.0
    %2543 = vmatpush1.msra.mxu0 0.0
    %2544 = vmatprep.subr.mxu0 0.0
    %2545 = vmatpush1.msra.mxu0 0.0
    %2546 = vmatprep.subr.mxu0 0.0
    %2547 = vmatpush1.msra.mxu0 0.0
    %2548 = vmatprep.subr.mxu0 0.0
    %2549 = vmatpush1.msra.mxu0 0.0
    %2550 = vmatprep.subr.mxu0 0.0
    %2551 = vmatpush1.msra.mxu0 0.0
    %2552 = vmatprep.subr.mxu0 0.0
    %2553 = vmatpush1.msra.mxu0 0.0
    %2554 = vmatprep.subr.mxu0 0.0
    %2555 = vmatpush1.msra.mxu0 0.0
    %2556 = vmatprep.subr.mxu0 0.0
    %2557 = vmatpush1.msra.mxu0 0.0
    %2558 = vmatprep.subr.mxu0 0.0
    %2559 = vmatpush1.msra.mxu0 0.0
    %2560 = vmatprep.mubr.f32.mxu0 0.0
    %2561 = vmatmul.mubr.f32.gmra.mrb[0].mxu0 %v2494
    %v2562 = vpop.f32.mrb[0].mxu0
    %v2563 = vadd.f32 0.0, %v2562
    %v2564 = vpop.f32.mrb[0].mxu0
    %2565 = vdwg.mxu0
    %v2567 = vrot.slane %v2563, 7
    %v2569 = vadd.f32 %v2005, %v2567
    %v2570 = vmax.f32 %v2569, 0.0
    %vm2571 = vcmask 1040384
    %v2572 = vsel %vm2571, %v1433, %v2570
    %v2573 = vld [vmem:[%s3 + $0xc0] sm:$0xff]
    %v2574 = vld [vmem:[%s3 + $0xc8] sm:$0xff]
    %v2575 = vld [vmem:[%s3 + $0xd0] sm:$0xff]
    %v2576 = vld [vmem:[%s3 + $0xd8] sm:$0xff]
    %v2577 = vld [vmem:[%s3 + $0xe0] sm:$0x1]
    %v2578 = vlaneseq
    %v2579 = vshrl.u32 %v2578, 7
    %v2580 = vsub.s32 0, %v2579
    %v2581 = vrot.slane %v2577, %v2580
    %v2583 = vsel %vm31, %v2572, 0
    %2585 = vmatprep.subr.mxu0 0.0
    %2586 = vmatpush1.msra.mxu0 %v2573
    %2587 = vmatprep.subr.mxu0 0.0
    %2588 = vmatpush1.msra.mxu0 %v2574
    %2589 = vmatprep.subr.mxu0 0.0
    %2590 = vmatpush1.msra.mxu0 %v2575
    %2591 = vmatprep.subr.mxu0 0.0
    %2592 = vmatpush1.msra.mxu0 %v2576
    %2593 = vmatprep.subr.mxu0 0.0
    %2594 = vmatpush1.msra.mxu0 0.0
    %2595 = vmatprep.subr.mxu0 0.0
    %2596 = vmatpush1.msra.mxu0 0.0
    %2597 = vmatprep.subr.mxu0 0.0
    %2598 = vmatpush1.msra.mxu0 0.0
    %2599 = vmatprep.subr.mxu0 0.0
    %2600 = vmatpush1.msra.mxu0 0.0
    %2601 = vmatprep.subr.mxu0 0.0
    %2602 = vmatpush1.msra.mxu0 0.0
    %2603 = vmatprep.subr.mxu0 0.0
    %2604 = vmatpush1.msra.mxu0 0.0
    %2605 = vmatprep.subr.mxu0 0.0
    %2606 = vmatpush1.msra.mxu0 0.0
    %2607 = vmatprep.subr.mxu0 0.0
    %2608 = vmatpush1.msra.mxu0 0.0
    %2609 = vmatprep.subr.mxu0 0.0
    %2610 = vmatpush1.msra.mxu0 0.0
    %2611 = vmatprep.subr.mxu0 0.0
    %2612 = vmatpush1.msra.mxu0 0.0
    %2613 = vmatprep.subr.mxu0 0.0
    %2614 = vmatpush1.msra.mxu0 0.0
    %2615 = vmatprep.subr.mxu0 0.0
    %2616 = vmatpush1.msra.mxu0 0.0
    %2617 = vmatprep.subr.mxu0 0.0
    %2618 = vmatpush1.msra.mxu0 0.0
    %2619 = vmatprep.subr.mxu0 0.0
    %2620 = vmatpush1.msra.mxu0 0.0
    %2621 = vmatprep.subr.mxu0 0.0
    %2622 = vmatpush1.msra.mxu0 0.0
    %2623 = vmatprep.subr.mxu0 0.0
    %2624 = vmatpush1.msra.mxu0 0.0
    %2625 = vmatprep.subr.mxu0 0.0
    %2626 = vmatpush1.msra.mxu0 0.0
    %2627 = vmatprep.subr.mxu0 0.0
    %2628 = vmatpush1.msra.mxu0 0.0
    %2629 = vmatprep.subr.mxu0 0.0
    %2630 = vmatpush1.msra.mxu0 0.0
    %2631 = vmatprep.subr.mxu0 0.0
    %2632 = vmatpush1.msra.mxu0 0.0
    %2633 = vmatprep.subr.mxu0 0.0
    %2634 = vmatpush1.msra.mxu0 0.0
    %2635 = vmatprep.subr.mxu0 0.0
    %2636 = vmatpush1.msra.mxu0 0.0
    %2637 = vmatprep.subr.mxu0 0.0
    %2638 = vmatpush1.msra.mxu0 0.0
    %2639 = vmatprep.subr.mxu0 0.0
    %2640 = vmatpush1.msra.mxu0 0.0
    %2641 = vmatprep.subr.mxu0 0.0
    %2642 = vmatpush1.msra.mxu0 0.0
    %2643 = vmatprep.subr.mxu0 0.0
    %2644 = vmatpush1.msra.mxu0 0.0
    %2645 = vmatprep.subr.mxu0 0.0
    %2646 = vmatpush1.msra.mxu0 0.0
    %2647 = vmatprep.subr.mxu0 0.0
    %2648 = vmatpush1.msra.mxu0 0.0
    %2649 = vmatprep.mubr.f32.mxu0 0.0
    %2650 = vmatmul.mubr.f32.gmra.mrb[0].mxu0 %v2583
    %v2651 = vpop.f32.mrb[0].mxu0
    %v2652 = vadd.f32 %v2581, %v2651
    %v2653 = vpop.f32.mrb[0].mxu0
    %2654 = vdwg.mxu0
    %v2655 = vmax.f32 %v2652, 0.0
    %v2656 = vld [vmem:[%s3 + $0xe8] sm:$0xff]
    %v2657 = vld [vmem:[%s3 + $0xf0] sm:$0xff]
    %v2658 = vld [vmem:[%s3 + $0xf8] sm:$0xff]
    %v2659 = vld [vmem:[%s3 + $0x100] sm:$0xff]
    %v2660 = vld [vmem:[%s3 + $0x108] sm:$0x1]
    %v2661 = vlaneseq
    %v2662 = vshrl.u32 %v2661, 7
    %v2663 = vsub.s32 0, %v2662
    %v2664 = vrot.slane %v2660, %v2663
    %v2666 = vsel %vm31, %v2655, 0
    %2668 = vmatprep.subr.mxu0 0.0
    %2669 = vmatpush1.msra.mxu0 %v2656
    %2670 = vmatprep.subr.mxu0 0.0
    %2671 = vmatpush1.msra.mxu0 %v2657
    %2672 = vmatprep.subr.mxu0 0.0
    %2673 = vmatpush1.msra.mxu0 %v2658
    %2674 = vmatprep.subr.mxu0 0.0
    %2675 = vmatpush1.msra.mxu0 %v2659
    %2676 = vmatprep.subr.mxu0 0.0
    %2677 = vmatpush1.msra.mxu0 0.0
    %2678 = vmatprep.subr.mxu0 0.0
    %2679 = vmatpush1.msra.mxu0 0.0
    %2680 = vmatprep.subr.mxu0 0.0
    %2681 = vmatpush1.msra.mxu0 0.0
    %2682 = vmatprep.subr.mxu0 0.0
    %2683 = vmatpush1.msra.mxu0 0.0
    %2684 = vmatprep.subr.mxu0 0.0
    %2685 = vmatpush1.msra.mxu0 0.0
    %2686 = vmatprep.subr.mxu0 0.0
    %2687 = vmatpush1.msra.mxu0 0.0
    %2688 = vmatprep.subr.mxu0 0.0
    %2689 = vmatpush1.msra.mxu0 0.0
    %2690 = vmatprep.subr.mxu0 0.0
    %2691 = vmatpush1.msra.mxu0 0.0
    %2692 = vmatprep.subr.mxu0 0.0
    %2693 = vmatpush1.msra.mxu0 0.0
    %2694 = vmatprep.subr.mxu0 0.0
    %2695 = vmatpush1.msra.mxu0 0.0
    %2696 = vmatprep.subr.mxu0 0.0
    %2697 = vmatpush1.msra.mxu0 0.0
    %2698 = vmatprep.subr.mxu0 0.0
    %2699 = vmatpush1.msra.mxu0 0.0
    %2700 = vmatprep.subr.mxu0 0.0
    %2701 = vmatpush1.msra.mxu0 0.0
    %2702 = vmatprep.subr.mxu0 0.0
    %2703 = vmatpush1.msra.mxu0 0.0
    %2704 = vmatprep.subr.mxu0 0.0
    %2705 = vmatpush1.msra.mxu0 0.0
    %2706 = vmatprep.subr.mxu0 0.0
    %2707 = vmatpush1.msra.mxu0 0.0
    %2708 = vmatprep.subr.mxu0 0.0
    %2709 = vmatpush1.msra.mxu0 0.0
    %2710 = vmatprep.subr.mxu0 0.0
    %2711 = vmatpush1.msra.mxu0 0.0
    %2712 = vmatprep.subr.mxu0 0.0
    %2713 = vmatpush1.msra.mxu0 0.0
    %2714 = vmatprep.subr.mxu0 0.0
    %2715 = vmatpush1.msra.mxu0 0.0
    %2716 = vmatprep.subr.mxu0 0.0
    %2717 = vmatpush1.msra.mxu0 0.0
    %2718 = vmatprep.subr.mxu0 0.0
    %2719 = vmatpush1.msra.mxu0 0.0
    %2720 = vmatprep.subr.mxu0 0.0
    %2721 = vmatpush1.msra.mxu0 0.0
    %2722 = vmatprep.subr.mxu0 0.0
    %2723 = vmatpush1.msra.mxu0 0.0
    %2724 = vmatprep.subr.mxu0 0.0
    %2725 = vmatpush1.msra.mxu0 0.0
    %2726 = vmatprep.subr.mxu0 0.0
    %2727 = vmatpush1.msra.mxu0 0.0
    %2728 = vmatprep.subr.mxu0 0.0
    %2729 = vmatpush1.msra.mxu0 0.0
    %2730 = vmatprep.subr.mxu0 0.0
    %2731 = vmatpush1.msra.mxu0 0.0
    %2732 = vmatprep.mubr.f32.mxu0 0.0
    %2733 = vmatmul.mubr.f32.gmra.mrb[0].mxu0 %v2666
    %v2734 = vpop.f32.mrb[0].mxu0
    %v2735 = vadd.f32 %v2664, %v2734
    %v2736 = vpop.f32.mrb[0].mxu0
    %2737 = vdwg.mxu0
    %v2738 = vmax.f32 %v2735, 0.0
    %v2739 = vld [vmem:[%s3 + $0x110] sm:$0xff]
    %v2740 = vld [vmem:[%s3 + $0x118] sm:$0xff]
    %v2741 = vld [vmem:[%s3 + $0x120] sm:$0xff]
    %v2742 = vld [vmem:[%s3 + $0x128] sm:$0xff]
    %v2743 = vld [vmem:[%s3 + $0x130] sm:$0x1]
    %v2744 = vlaneseq
    %v2745 = vshrl.u32 %v2744, 7
    %v2746 = vsub.s32 0, %v2745
    %v2747 = vrot.slane %v2743, %v2746
    %v2749 = vsel %vm31, %v2738, 0
    %2751 = vmatprep.subr.mxu0 0.0
    %2752 = vmatpush1.msra.mxu0 %v2739
    %2753 = vmatprep.subr.mxu0 0.0
    %2754 = vmatpush1.msra.mxu0 %v2740
    %2755 = vmatprep.subr.mxu0 0.0
    %2756 = vmatpush1.msra.mxu0 %v2741
    %2757 = vmatprep.subr.mxu0 0.0
    %2758 = vmatpush1.msra.mxu0 %v2742
    %2759 = vmatprep.subr.mxu0 0.0
    %2760 = vmatpush1.msra.mxu0 0.0
    %2761 = vmatprep.subr.mxu0 0.0
    %2762 = vmatpush1.msra.mxu0 0.0
    %2763 = vmatprep.subr.mxu0 0.0
    %2764 = vmatpush1.msra.mxu0 0.0
    %2765 = vmatprep.subr.mxu0 0.0
    %2766 = vmatpush1.msra.mxu0 0.0
    %2767 = vmatprep.subr.mxu0 0.0
    %2768 = vmatpush1.msra.mxu0 0.0
    %2769 = vmatprep.subr.mxu0 0.0
    %2770 = vmatpush1.msra.mxu0 0.0
    %2771 = vmatprep.subr.mxu0 0.0
    %2772 = vmatpush1.msra.mxu0 0.0
    %2773 = vmatprep.subr.mxu0 0.0
    %2774 = vmatpush1.msra.mxu0 0.0
    %2775 = vmatprep.subr.mxu0 0.0
    %2776 = vmatpush1.msra.mxu0 0.0
    %2777 = vmatprep.subr.mxu0 0.0
    %2778 = vmatpush1.msra.mxu0 0.0
    %2779 = vmatprep.subr.mxu0 0.0
    %2780 = vmatpush1.msra.mxu0 0.0
    %2781 = vmatprep.subr.mxu0 0.0
    %2782 = vmatpush1.msra.mxu0 0.0
    %2783 = vmatprep.subr.mxu0 0.0
    %2784 = vmatpush1.msra.mxu0 0.0
    %2785 = vmatprep.subr.mxu0 0.0
    %2786 = vmatpush1.msra.mxu0 0.0
    %2787 = vmatprep.subr.mxu0 0.0
    %2788 = vmatpush1.msra.mxu0 0.0
    %2789 = vmatprep.subr.mxu0 0.0
    %2790 = vmatpush1.msra.mxu0 0.0
    %2791 = vmatprep.subr.mxu0 0.0
    %2792 = vmatpush1.msra.mxu0 0.0
    %2793 = vmatprep.subr.mxu0 0.0
    %2794 = vmatpush1.msra.mxu0 0.0
    %2795 = vmatprep.subr.mxu0 0.0
    %2796 = vmatpush1.msra.mxu0 0.0
    %2797 = vmatprep.subr.mxu0 0.0
    %2798 = vmatpush1.msra.mxu0 0.0
    %2799 = vmatprep.subr.mxu0 0.0
    %2800 = vmatpush1.msra.mxu0 0.0
    %2801 = vmatprep.subr.mxu0 0.0
    %2802 = vmatpush1.msra.mxu0 0.0
    %2803 = vmatprep.subr.mxu0 0.0
    %2804 = vmatpush1.msra.mxu0 0.0
    %2805 = vmatprep.subr.mxu0 0.0
    %2806 = vmatpush1.msra.mxu0 0.0
    %2807 = vmatprep.subr.mxu0 0.0
    %2808 = vmatpush1.msra.mxu0 0.0
    %2809 = vmatprep.subr.mxu0 0.0
    %2810 = vmatpush1.msra.mxu0 0.0
    %2811 = vmatprep.subr.mxu0 0.0
    %2812 = vmatpush1.msra.mxu0 0.0
    %2813 = vmatprep.subr.mxu0 0.0
    %2814 = vmatpush1.msra.mxu0 0.0
    %2815 = vmatprep.mubr.f32.mxu0 0.0
    %2816 = vmatmul.mubr.f32.gmra.mrb[0].mxu0 %v2749
    %v2817 = vpop.f32.mrb[0].mxu0
    %v2818 = vadd.f32 %v2747, %v2817
    %v2819 = vpop.f32.mrb[0].mxu0
    %2820 = vdwg.mxu0
    %v2821 = vmax.f32 %v2818, 0.0
    %v2822 = vld [vmem:[%s3 + $0x138] sm:$0xff]
    %v2823 = vld [vmem:[%s3 + $0x140] sm:$0xff]
    %v2824 = vld [vmem:[%s3 + $0x148] sm:$0xff]
    %v2825 = vld [vmem:[%s3 + $0x150] sm:$0xff]
    %v2826 = vld [vmem:[%s3 + $0x158] sm:$0x1]
    %v2827 = vlaneseq
    %v2828 = vshrl.u32 %v2827, 7
    %v2829 = vsub.s32 0, %v2828
    %v2830 = vrot.slane %v2826, %v2829
    %v2832 = vsel %vm31, %v2821, 0
    %2834 = vmatprep.subr.mxu0 0.0
    %2835 = vmatpush1.msra.mxu0 %v2822
    %2836 = vmatprep.subr.mxu0 0.0
    %2837 = vmatpush1.msra.mxu0 %v2823
    %2838 = vmatprep.subr.mxu0 0.0
    %2839 = vmatpush1.msra.mxu0 %v2824
    %2840 = vmatprep.subr.mxu0 0.0
    %2841 = vmatpush1.msra.mxu0 %v2825
    %2842 = vmatprep.subr.mxu0 0.0
    %2843 = vmatpush1.msra.mxu0 0.0
    %2844 = vmatprep.subr.mxu0 0.0
    %2845 = vmatpush1.msra.mxu0 0.0
    %2846 = vmatprep.subr.mxu0 0.0
    %2847 = vmatpush1.msra.mxu0 0.0
    %2848 = vmatprep.subr.mxu0 0.0
    %2849 = vmatpush1.msra.mxu0 0.0
    %2850 = vmatprep.subr.mxu0 0.0
    %2851 = vmatpush1.msra.mxu0 0.0
    %2852 = vmatprep.subr.mxu0 0.0
    %2853 = vmatpush1.msra.mxu0 0.0
    %2854 = vmatprep.subr.mxu0 0.0
    %2855 = vmatpush1.msra.mxu0 0.0
    %2856 = vmatprep.subr.mxu0 0.0
    %2857 = vmatpush1.msra.mxu0 0.0
    %2858 = vmatprep.subr.mxu0 0.0
    %2859 = vmatpush1.msra.mxu0 0.0
    %2860 = vmatprep.subr.mxu0 0.0
    %2861 = vmatpush1.msra.mxu0 0.0
    %2862 = vmatprep.subr.mxu0 0.0
    %2863 = vmatpush1.msra.mxu0 0.0
    %2864 = vmatprep.subr.mxu0 0.0
    %2865 = vmatpush1.msra.mxu0 0.0
    %2866 = vmatprep.subr.mxu0 0.0
    %2867 = vmatpush1.msra.mxu0 0.0
    %2868 = vmatprep.subr.mxu0 0.0
    %2869 = vmatpush1.msra.mxu0 0.0
    %2870 = vmatprep.subr.mxu0 0.0
    %2871 = vmatpush1.msra.mxu0 0.0
    %2872 = vmatprep.subr.mxu0 0.0
    %2873 = vmatpush1.msra.mxu0 0.0
    %2874 = vmatprep.subr.mxu0 0.0
    %2875 = vmatpush1.msra.mxu0 0.0
    %2876 = vmatprep.subr.mxu0 0.0
    %2877 = vmatpush1.msra.mxu0 0.0
    %2878 = vmatprep.subr.mxu0 0.0
    %2879 = vmatpush1.msra.mxu0 0.0
    %2880 = vmatprep.subr.mxu0 0.0
    %2881 = vmatpush1.msra.mxu0 0.0
    %2882 = vmatprep.subr.mxu0 0.0
    %2883 = vmatpush1.msra.mxu0 0.0
    %2884 = vmatprep.subr.mxu0 0.0
    %2885 = vmatpush1.msra.mxu0 0.0
    %2886 = vmatprep.subr.mxu0 0.0
    %2887 = vmatpush1.msra.mxu0 0.0
    %2888 = vmatprep.subr.mxu0 0.0
    %2889 = vmatpush1.msra.mxu0 0.0
    %2890 = vmatprep.subr.mxu0 0.0
    %2891 = vmatpush1.msra.mxu0 0.0
    %2892 = vmatprep.subr.mxu0 0.0
    %2893 = vmatpush1.msra.mxu0 0.0
    %2894 = vmatprep.subr.mxu0 0.0
    %2895 = vmatpush1.msra.mxu0 0.0
    %2896 = vmatprep.subr.mxu0 0.0
    %2897 = vmatpush1.msra.mxu0 0.0
    %2898 = vmatprep.mubr.f32.mxu0 0.0
    %2899 = vmatmul.mubr.f32.gmra.mrb[0].mxu0 %v2832
    %v2900 = vpop.f32.mrb[0].mxu0
    %v2901 = vadd.f32 %v2830, %v2900
    %v2902 = vpop.f32.mrb[0].mxu0
    %2903 = vdwg.mxu0
    %v2904 = vsub.f32 %v2901, %v21
    %v2905 = vmul.f32 %v2904, %v2904
    %vm2906 = vcmask 254976
    %v2907 = vsel %vm2906, %v2905, 0.0
    %2908 = vadd.xlane.f32.xlu0 %v2907
    %v2909 = vpop.xlane.xlu0 %2908
    %vm2910 = vcmask 1041408
    %v2911 = vsel %vm2910, %v2909, 0.0
    %v2912 = vrot.slane %v2911, 4
    %v2913 = vadd.f32 %v2911, %v2912
    %v2914 = vrot.slane %v2913, 2
    %v2915 = vadd.f32 %v2913, %v2914
    %v2916 = vrot.slane %v2915, 1
    %v2917 = vadd.f32 %v2915, %v2916
    %v2918 = vmul.f32 %v2917, 0.017857144
    %vm2919 = vcmask 0
    %2920 = vst.msk [vmem:[#allocation2] sm:$0x1] %vm2919, %v2918
    // Predicated region
    $region18: #{bc_policy_forward.1} parent=1 // pred_check
      _
    $region19: #{bc_policy_forward.1} parent=1 // pred_check_branch
      %2922 = sbr.rel (0) target = $region21
    $region20: #{bc_policy_forward.1} parent=1 // pred_region
      %s2924 = ssub.s32 16, 16
      %2925 = vsyncadd [#allocation3], %s2924
      %s2927 = sshll.u32 [#allocation2], 4
      %s2928 = int_to_ptr.vmem [resolvable:$true] %s2927
      %2930 = dma.vmem_to_hbm [thread:$0]  %s2928, 16, %s4, [#allocation3]
    $region21: #{bc_policy_forward.1} parent=1 // pred_fallthru
      _
    // Predicated region
    $region22: #{bc_policy_forward.1} parent=1 // pred_check
      _
    $region23: #{bc_policy_forward.1} parent=1 // pred_check_branch
      %2932 = sbr.rel (0) target = $region25
    $region24: #{bc_policy_forward.1} parent=1 // pred_region
      %2933 = dma.done [#allocation3], 16
    $region25: #{bc_policy_forward.1} parent=1 // pred_fallthru
      _
    %2934 = vsyncpa [#allocation3], 1

</llo_original>
